<compile_context>
chip_gen: v6e
topology: v6e:2x2x1
jax: 0.10.0
libtpu: 0.0.40
codegen_flags: <defaults>
</compile_context>

<pallas_src>
import functools

import jax
import jax.numpy as jnp
from jax.experimental import pallas as pl
from jax.experimental.pallas import tpu as pltpu


def convlstm_kernel(w_ref, b_ref, x_ref, h_ref, c_ref,
                    gates_ref, hout_ref, cout_ref,
                    spad_ref, patch_ref,
                    *, H, W, cin, hid, k, c_pad, pad):
    """One grid step == one batch element (image), spatially flattened.

    w_ref     : (4*hid, k*k*c_pad)    packed conv weights
    b_ref     : (4*hid, 1)            conv bias
    x_ref     : (1, cin, H*W)         input, channel-first, flattened space
    h_ref     : (1, hid, H*W)         previous hidden
    c_ref     : (1, hid, H*W)         previous cell (f32)
    gates_ref : (1, 4*hid, H*W)       raw pre-activation gates (f32)
    hout_ref  : (1, hid, H*W)         new hidden (f32)
    cout_ref  : (1, hid, H*W)         new cell (f32)
    spad_ref  : (c_pad, pad+H*W+pad)  halo-padded stacked [h; x; 0] (scratch)
    patch_ref : (k*k*c_pad, H*W)      im2col patch (scratch)
    """
    HW = H * W
    p = k // 2

    # Stage the stacked input [h; x; 0-pad-channels] with a zero halo on the
    # flattened spatial axis.  The zero halo provides the y-boundary zeros of
    # the "SAME" convolution for free.
    spad_ref[...] = jnp.zeros_like(spad_ref)
    spad_ref[0:hid, pad:pad + HW] = h_ref[0]
    spad_ref[hid:hid + cin, pad:pad + HW] = x_ref[0]

    # x-coordinate of every output column, for masking row wrap-around.
    x_col = jax.lax.broadcasted_iota(jnp.int32, (1, HW), 1) % W
    masks = [None] * k
    for kx in range(k):
        ox = kx - p
        if ox != 0:
            masks[kx] = (x_col + ox >= 0) & (x_col + ox < W)

    # Build the im2col patch: one (c_pad, HW) lane-shifted slab per conv tap.
    for ky in range(k):
        for kx in range(k):
            d = (ky - p) * W + (kx - p)
            slab = spad_ref[:, pad + d:pad + d + HW]
            if masks[kx] is not None:
                slab = jnp.where(masks[kx], slab, jnp.zeros_like(slab))
            t = ky * k + kx
            patch_ref[t * c_pad:(t + 1) * c_pad, :] = slab

    # Single fused MXU matmul over K = k*k*c_pad, f32 accumulation, + bias.
    gates = jnp.dot(w_ref[...], patch_ref[...],
                    preferred_element_type=jnp.float32) + b_ref[...]
    gates_ref[0] = gates                                  # raw gates output

    # chunk(4, channel) order: in, remember, out, cell.  Sublane-aligned rows.
    in_g = jax.nn.sigmoid(gates[0 * hid:1 * hid])
    rem_g = jax.nn.sigmoid(gates[1 * hid:2 * hid])
    out_g = jax.nn.sigmoid(gates[2 * hid:3 * hid])
    cell_g = jnp.tanh(gates[3 * hid:4 * hid])

    cell = rem_g * c_ref[0] + in_g * cell_g
    hidden = out_g * jnp.tanh(cell)

    cout_ref[0] = cell
    hout_ref[0] = hidden


def _pack_weights(w_oihw, cin, hid, k, c_pad):
    """PyTorch (4*hid, cin+hid, k, k) -> (4*hid, k*k*c_pad) matching the
    per-tap patch row order [h channels, x channels, zero pad]."""
    G = w_oihw.shape[0]
    w_t = jnp.transpose(w_oihw, (2, 3, 1, 0))                      # (k,k,C,G)
    w_reord = jnp.concatenate([w_t[:, :, cin:, :],                 # h weights
                               w_t[:, :, :cin, :]], axis=2)        # x weights
    w_padded = jnp.pad(w_reord,
                       ((0, 0), (0, 0), (0, c_pad - (cin + hid)), (0, 0)))
    return w_padded.reshape(k * k * c_pad, G).T                    # (G, K)


def conv_lstm_cell(x, h_prev, c_prev, w_oihw, bias, kernel,
                   compute_dtype=jnp.float32):
    """ConvLSTM forward.  x: (N, cin, H, W) NCHW (PyTorch layout).
    Returns (gates, hidden, cell) in NCHW, matching the PyTorch module.
    compute_dtype: dtype of the matmul operands (bf16 recommended on v6e/v7x);
    accumulation and all gate/state math stay f32."""
    N, cin, H, W = x.shape
    # TODO(synk): even kernel sizes need asymmetric padding to match Conv2d.
    assert kernel % 2 == 1, "only odd kernel sizes match Conv2d(padding=k//2)"
    hid = w_oihw.shape[0] // 4
    if h_prev is None:           # mirrors the module's `prev_hidden is None`
        h_prev = jnp.zeros((N, hid, H, W), x.dtype)
        c_prev = jnp.zeros((N, hid, H, W), x.dtype)

    HW = H * W
    p = kernel // 2
    c_pad = -(-(cin + hid) // 16) * 16          # per-tap rows, sublane aligned
    halo = p * W + p                            # max |flat shift|
    pad = -(-halo // 128) * 128                 # lane-tile aligned halo pad
    K = kernel * kernel * c_pad

    # Layout plumbing only (free reshapes / dtype casts) — no concat, no pad.
    x_cf = x.reshape(N, cin, HW).astype(compute_dtype)
    h_cf = h_prev.reshape(N, hid, HW).astype(compute_dtype)
    c_cf = c_prev.reshape(N, hid, HW).astype(jnp.float32)
    w_mat = _pack_weights(w_oihw, cin, hid, kernel, c_pad).astype(compute_dtype)
    b2 = bias.reshape(4 * hid, 1).astype(jnp.float32)

    kern = functools.partial(convlstm_kernel, H=H, W=W, cin=cin, hid=hid,
                             k=kernel, c_pad=c_pad, pad=pad)

    out_shapes = (
        jax.ShapeDtypeStruct((N, 4 * hid, HW), jnp.float32),
        jax.ShapeDtypeStruct((N, hid, HW), jnp.float32),
        jax.ShapeDtypeStruct((N, hid, HW), jnp.float32),
    )

    gates, hidden, cell = pl.pallas_call(
        kern,
        out_shape=out_shapes,
        grid=(N,),
        in_specs=[
            pl.BlockSpec((4 * hid, K), lambda n: (0, 0)),
            pl.BlockSpec((4 * hid, 1), lambda n: (0, 0)),
            pl.BlockSpec((1, cin, HW), lambda n: (n, 0, 0)),
            pl.BlockSpec((1, hid, HW), lambda n: (n, 0, 0)),
            pl.BlockSpec((1, hid, HW), lambda n: (n, 0, 0)),
        ],
        out_specs=(
            pl.BlockSpec((1, 4 * hid, HW), lambda n: (n, 0, 0)),
            pl.BlockSpec((1, hid, HW), lambda n: (n, 0, 0)),
            pl.BlockSpec((1, hid, HW), lambda n: (n, 0, 0)),
        ),
        scratch_shapes=[
            pltpu.VMEM((c_pad, 2 * pad + HW), compute_dtype),   # halo-padded input
            pltpu.VMEM((K, HW), compute_dtype),                 # im2col patch
        ],
        compiler_params=pltpu.CompilerParams(
            dimension_semantics=("parallel",),
            vmem_limit_bytes=32 * 1024 * 1024),
    )(w_mat, b2, x_cf, h_cf, c_cf)

    return (gates.reshape(N, 4 * hid, H, W),
            hidden.reshape(N, hid, H, W),
            cell.reshape(N, hid, H, W))


def reference_conv_lstm(x, h_prev, c_prev, w_oihw, bias):
    """Pure-JAX reference (mirrors the PyTorch forward, NCHW)."""
    p = w_oihw.shape[-1] // 2
    stacked = jnp.concatenate([x, h_prev], axis=1)
    gates = jax.lax.conv_general_dilated(
        stacked, w_oihw, window_strides=(1, 1),
        padding=[(p, p), (p, p)],
        dimension_numbers=("NCHW", "OIHW", "NCHW"),
        precision=jax.lax.Precision.HIGHEST) + bias[None, :, None, None]
    hid = h_prev.shape[1]
    in_g, rem_g, out_g, cell_g = jnp.split(gates, 4, axis=1)
    in_g, rem_g, out_g = map(jax.nn.sigmoid, (in_g, rem_g, out_g))
    cell_g = jnp.tanh(cell_g)
    cell = rem_g * c_prev + in_g * cell_g
    hidden = out_g * jnp.tanh(cell)
    return gates, hidden, cell


if __name__ == "__main__":
    # Module hyper-parameters (consistent with the module's __init__).
    input_size, hidden_size, kernel = 4, 8, 3
    N, H, W = 2, 16, 16
    C = input_size + hidden_size

    key = jax.random.PRNGKey(0)
    k_x, k_h, k_c, k_w, k_b = jax.random.split(key, 5)

    # PyTorch Conv2d-style uniform init, PyTorch weight layout (O, I, kh, kw).
    fan_in = C * kernel * kernel
    bound = 1.0 / (fan_in ** 0.5)
    w_oihw = jax.random.uniform(
        k_w, (4 * hidden_size, C, kernel, kernel),
        minval=-bound, maxval=bound, dtype=jnp.float32)
    bias = jax.random.uniform(
        k_b, (4 * hidden_size,), minval=-bound, maxval=bound,
        dtype=jnp.float32)

    # Inputs in NCHW, exactly as the PyTorch module takes them.
    x = jax.random.normal(k_x, (N, input_size, H, W), dtype=jnp.float32)
    h_prev = jax.random.normal(k_h, (N, hidden_size, H, W), dtype=jnp.float32)
    c_prev = jax.random.normal(k_c, (N, hidden_size, H, W), dtype=jnp.float32)

    g_exp, h_exp, c_exp = reference_conv_lstm(x, h_prev, c_prev, w_oihw, bias)

    # f32 path — tight correctness check.
    gates, hidden, cell = jax.block_until_ready(
        conv_lstm_cell(x, h_prev, c_prev, w_oihw, bias, kernel,
                       compute_dtype=jnp.float32))
    assert jnp.allclose(gates, g_exp, atol=1e-3, rtol=1e-3)
    assert jnp.allclose(hidden, h_exp, atol=1e-3, rtol=1e-3)
    assert jnp.allclose(cell, c_exp, atol=1e-3, rtol=1e-3)

    # bf16-operand path (v6e/v7x performance config) — loose check.
    gates_b, hidden_b, cell_b = jax.block_until_ready(
        conv_lstm_cell(x, h_prev, c_prev, w_oihw, bias, kernel,
                       compute_dtype=jnp.bfloat16))
    assert jnp.allclose(gates_b, g_exp, atol=6e-2, rtol=6e-2)
    assert jnp.allclose(hidden_b, h_exp, atol=6e-2, rtol=6e-2)
    assert jnp.allclose(cell_b, c_exp, atol=6e-2, rtol=6e-2)

    print("KERNEL_OK")
</pallas_src>

<mosaic_0001>
module attributes {stable_mosaic.version = 11 : i64} {
  func.func @convlstm_kernel(%arg0: i32, %arg1: memref<32x144xf32, #tpu.memory_space<vmem>>, %arg2: memref<32x1xf32, #tpu.memory_space<vmem>>, %arg3: memref<1x4x256xf32, #tpu.memory_space<vmem>>, %arg4: memref<1x8x256xf32, #tpu.memory_space<vmem>>, %arg5: memref<1x8x256xf32, #tpu.memory_space<vmem>>, %arg6: memref<1x32x256xf32, #tpu.memory_space<vmem>>, %arg7: memref<1x8x256xf32, #tpu.memory_space<vmem>>, %arg8: memref<1x8x256xf32, #tpu.memory_space<vmem>>, %arg9: memref<16x512xf32, #tpu.memory_space<vmem>>, %arg10: memref<144x256xf32, #tpu.memory_space<vmem>>) attributes {dimension_semantics = [#tpu.dimension_semantics<parallel>], iteration_bounds = array<i64: 2>, scalar_prefetch = 0 : i64, scratch_operands = 2 : i64, tpu.core_type = #tpu.core_type<tc>, window_params = [{pipeline_mode = #tpu.pipeline_mode<synchronous>, transform_indices = @transform_0, window_bounds = array<i64: 32, 144>}, {pipeline_mode = #tpu.pipeline_mode<synchronous>, transform_indices = @transform_1, window_bounds = array<i64: 32, 1>}, {transform_indices = @transform_2, window_bounds = array<i64: 1, 4, 256>}, {transform_indices = @transform_3, window_bounds = array<i64: 1, 8, 256>}, {transform_indices = @transform_4, window_bounds = array<i64: 1, 8, 256>}, {transform_indices = @transform_5, window_bounds = array<i64: 1, 32, 256>}, {transform_indices = @transform_6, window_bounds = array<i64: 1, 8, 256>}, {transform_indices = @transform_7, window_bounds = array<i64: 1, 8, 256>}]} {
    %cst = arith.constant 0.000000e+00 : f32
    %0 = vector.broadcast %cst : f32 to vector<16x512xf32>
    %c0 = arith.constant 0 : index
    %c0_0 = arith.constant 0 : index
    %1 = vector.load %arg9[%c0, %c0_0] : memref<16x512xf32, #tpu.memory_space<vmem>>, vector<16x512xf32>
    tpu.vector_store %arg9[%c0, %c0_0], %0 {strides = array<i32>} : memref<16x512xf32, #tpu.memory_space<vmem>>, vector<16x512xf32>,
    %c0_1 = arith.constant 0 : index
    %c0_2 = arith.constant 0 : index
    %c0_3 = arith.constant 0 : index
    %2 = vector.load %arg4[%c0_1, %c0_2, %c0_3] : memref<1x8x256xf32, #tpu.memory_space<vmem>>, vector<1x8x256xf32>
    %3 = vector.shape_cast %2 : vector<1x8x256xf32> to vector<8x256xf32>
    %c0_4 = arith.constant 0 : index
    %c128 = arith.constant 128 : index
    %4 = vector.load %arg9[%c0_4, %c128] : memref<16x512xf32, #tpu.memory_space<vmem>>, vector<8x256xf32>
    tpu.vector_store %arg9[%c0_4, %c128], %3 {strides = array<i32>} : memref<16x512xf32, #tpu.memory_space<vmem>>, vector<8x256xf32>,
    %c0_5 = arith.constant 0 : index
    %c0_6 = arith.constant 0 : index
    %c0_7 = arith.constant 0 : index
    %5 = vector.load %arg3[%c0_5, %c0_6, %c0_7] : memref<1x4x256xf32, #tpu.memory_space<vmem>>, vector<1x4x256xf32>
    %6 = vector.shape_cast %5 : vector<1x4x256xf32> to vector<4x256xf32>
    %c8 = arith.constant 8 : index
    %c128_8 = arith.constant 128 : index
    %7 = vector.load %arg9[%c8, %c128_8] : memref<16x512xf32, #tpu.memory_space<vmem>>, vector<4x256xf32>
    tpu.vector_store %arg9[%c8, %c128_8], %6 {strides = array<i32>} : memref<16x512xf32, #tpu.memory_space<vmem>>, vector<4x256xf32>,
    %8 = tpu.iota {dimensions = array<i32: 1>} : vector<1x256xi32>
    %c16_i32 = arith.constant 16 : i32
    %c0_i32 = arith.constant 0 : i32
    %9 = arith.cmpi eq, %c16_i32, %c0_i32 : i32
    %c1_i32 = arith.constant 1 : i32
    %10 = arith.select %9, %c1_i32, %c16_i32 : i32
    %11 = vector.broadcast %10 : i32 to vector<1x256xi32>
    %12 = arith.remsi %8, %11 : vector<1x256xi32>
    %c0_i32_9 = arith.constant 0 : i32
    %13 = vector.broadcast %c0_i32_9 : i32 to vector<1x256xi32>
    %14 = arith.cmpi ne, %12, %13 : vector<1x256xi32>
    %c0_i32_10 = arith.constant 0 : i32
    %15 = vector.broadcast %c0_i32_10 : i32 to vector<1x256xi32>
    %16 = arith.cmpi slt, %12, %15 : vector<1x256xi32>
    %c0_i32_11 = arith.constant 0 : i32
    %17 = arith.cmpi slt, %10, %c0_i32_11 : i32
    %18 = vector.broadcast %17 : i1 to vector<1x256xi1>
    %19 = vector.broadcast %18 : vector<1x256xi1> to vector<1x256xi1>
    %20 = arith.xori %16, %19 : vector<1x256xi1>
    %21 = arith.andi %20, %14 : vector<1x256xi1>
    %22 = vector.broadcast %10 : i32 to vector<1x256xi32>
    %23 = arith.addi %12, %22 : vector<1x256xi32>
    %24 = arith.select %21, %23, %12 : vector<1x256xi1>, vector<1x256xi32>
    %c-1_i32 = arith.constant -1 : i32
    %25 = vector.broadcast %c-1_i32 : i32 to vector<1x256xi32>
    %26 = arith.addi %24, %25 : vector<1x256xi32>
    %c0_i32_12 = arith.constant 0 : i32
    %27 = vector.broadcast %c0_i32_12 : i32 to vector<1x256xi32>
    %28 = arith.cmpi sge, %26, %27 : vector<1x256xi32>
    %c-1_i32_13 = arith.constant -1 : i32
    %29 = vector.broadcast %c-1_i32_13 : i32 to vector<1x256xi32>
    %30 = arith.addi %24, %29 : vector<1x256xi32>
    %c16_i32_14 = arith.constant 16 : i32
    %31 = vector.broadcast %c16_i32_14 : i32 to vector<1x256xi32>
    %32 = arith.cmpi slt, %30, %31 : vector<1x256xi32>
    %33 = arith.andi %28, %32 : vector<1x256xi1>
    %c1_i32_15 = arith.constant 1 : i32
    %34 = vector.broadcast %c1_i32_15 : i32 to vector<1x256xi32>
    %35 = arith.addi %24, %34 : vector<1x256xi32>
    %c0_i32_16 = arith.constant 0 : i32
    %36 = vector.broadcast %c0_i32_16 : i32 to vector<1x256xi32>
    %37 = arith.cmpi sge, %35, %36 : vector<1x256xi32>
    %c1_i32_17 = arith.constant 1 : i32
    %38 = vector.broadcast %c1_i32_17 : i32 to vector<1x256xi32>
    %39 = arith.addi %24, %38 : vector<1x256xi32>
    %c16_i32_18 = arith.constant 16 : i32
    %40 = vector.broadcast %c16_i32_18 : i32 to vector<1x256xi32>
    %41 = arith.cmpi slt, %39, %40 : vector<1x256xi32>
    %42 = arith.andi %37, %41 : vector<1x256xi1>
    %c0_19 = arith.constant 0 : index
    %c111 = arith.constant 111 : index
    %43 = vector.load %arg9[%c0_19, %c111] : memref<16x512xf32, #tpu.memory_space<vmem>>, vector<16x256xf32>
    %cst_20 = arith.constant 0.000000e+00 : f32
    %44 = vector.broadcast %cst_20 : f32 to vector<16x256xf32>
    %45 = vector.shape_cast %33 : vector<1x256xi1> to vector<1x256xi1>
    %46 = vector.broadcast %45 : vector<1x256xi1> to vector<16x256xi1>
    %47 = arith.select %46, %43, %44 : vector<16x256xi1>, vector<16x256xf32>
    %c0_21 = arith.constant 0 : index
    %c0_22 = arith.constant 0 : index
    %48 = vector.load %arg10[%c0_21, %c0_22] : memref<144x256xf32, #tpu.memory_space<vmem>>, vector<16x256xf32>
    tpu.vector_store %arg10[%c0_21, %c0_22], %47 {strides = array<i32>} : memref<144x256xf32, #tpu.memory_space<vmem>>, vector<16x256xf32>,
    %c0_23 = arith.constant 0 : index
    %c112 = arith.constant 112 : index
    %49 = vector.load %arg9[%c0_23, %c112] : memref<16x512xf32, #tpu.memory_space<vmem>>, vector<16x256xf32>
    %c16 = arith.constant 16 : index
    %c0_24 = arith.constant 0 : index
    %50 = vector.load %arg10[%c16, %c0_24] : memref<144x256xf32, #tpu.memory_space<vmem>>, vector<16x256xf32>
    tpu.vector_store %arg10[%c16, %c0_24], %49 {strides = array<i32>} : memref<144x256xf32, #tpu.memory_space<vmem>>, vector<16x256xf32>,
    %c0_25 = arith.constant 0 : index
    %c113 = arith.constant 113 : index
    %51 = vector.load %arg9[%c0_25, %c113] : memref<16x512xf32, #tpu.memory_space<vmem>>, vector<16x256xf32>
    %cst_26 = arith.constant 0.000000e+00 : f32
    %52 = vector.broadcast %cst_26 : f32 to vector<16x256xf32>
    %53 = vector.shape_cast %42 : vector<1x256xi1> to vector<1x256xi1>
    %54 = vector.broadcast %53 : vector<1x256xi1> to vector<16x256xi1>
    %55 = arith.select %54, %51, %52 : vector<16x256xi1>, vector<16x256xf32>
    %c32 = arith.constant 32 : index
    %c0_27 = arith.constant 0 : index
    %56 = vector.load %arg10[%c32, %c0_27] : memref<144x256xf32, #tpu.memory_space<vmem>>, vector<16x256xf32>
    tpu.vector_store %arg10[%c32, %c0_27], %55 {strides = array<i32>} : memref<144x256xf32, #tpu.memory_space<vmem>>, vector<16x256xf32>,
    %c0_28 = arith.constant 0 : index
    %c127 = arith.constant 127 : index
    %57 = vector.load %arg9[%c0_28, %c127] : memref<16x512xf32, #tpu.memory_space<vmem>>, vector<16x256xf32>
    %cst_29 = arith.constant 0.000000e+00 : f32
    %58 = vector.broadcast %cst_29 : f32 to vector<16x256xf32>
    %59 = vector.shape_cast %33 : vector<1x256xi1> to vector<1x256xi1>
    %60 = vector.broadcast %59 : vector<1x256xi1> to vector<16x256xi1>
    %61 = arith.select %60, %57, %58 : vector<16x256xi1>, vector<16x256xf32>
    %c48 = arith.constant 48 : index
    %c0_30 = arith.constant 0 : index
    %62 = vector.load %arg10[%c48, %c0_30] : memref<144x256xf32, #tpu.memory_space<vmem>>, vector<16x256xf32>
    tpu.vector_store %arg10[%c48, %c0_30], %61 {strides = array<i32>} : memref<144x256xf32, #tpu.memory_space<vmem>>, vector<16x256xf32>,
    %c0_31 = arith.constant 0 : index
    %c128_32 = arith.constant 128 : index
    %63 = vector.load %arg9[%c0_31, %c128_32] : memref<16x512xf32, #tpu.memory_space<vmem>>, vector<16x256xf32>
    %c64 = arith.constant 64 : index
    %c0_33 = arith.constant 0 : index
    %64 = vector.load %arg10[%c64, %c0_33] : memref<144x256xf32, #tpu.memory_space<vmem>>, vector<16x256xf32>
    tpu.vector_store %arg10[%c64, %c0_33], %63 {strides = array<i32>} : memref<144x256xf32, #tpu.memory_space<vmem>>, vector<16x256xf32>,
    %c0_34 = arith.constant 0 : index
    %c129 = arith.constant 129 : index
    %65 = vector.load %arg9[%c0_34, %c129] : memref<16x512xf32, #tpu.memory_space<vmem>>, vector<16x256xf32>
    %cst_35 = arith.constant 0.000000e+00 : f32
    %66 = vector.broadcast %cst_35 : f32 to vector<16x256xf32>
    %67 = vector.shape_cast %42 : vector<1x256xi1> to vector<1x256xi1>
    %68 = vector.broadcast %67 : vector<1x256xi1> to vector<16x256xi1>
    %69 = arith.select %68, %65, %66 : vector<16x256xi1>, vector<16x256xf32>
    %c80 = arith.constant 80 : index
    %c0_36 = arith.constant 0 : index
    %70 = vector.load %arg10[%c80, %c0_36] : memref<144x256xf32, #tpu.memory_space<vmem>>, vector<16x256xf32>
    tpu.vector_store %arg10[%c80, %c0_36], %69 {strides = array<i32>} : memref<144x256xf32, #tpu.memory_space<vmem>>, vector<16x256xf32>,
    %c0_37 = arith.constant 0 : index
    %c143 = arith.constant 143 : index
    %71 = vector.load %arg9[%c0_37, %c143] : memref<16x512xf32, #tpu.memory_space<vmem>>, vector<16x256xf32>
    %cst_38 = arith.constant 0.000000e+00 : f32
    %72 = vector.broadcast %cst_38 : f32 to vector<16x256xf32>
    %73 = vector.shape_cast %33 : vector<1x256xi1> to vector<1x256xi1>
    %74 = vector.broadcast %73 : vector<1x256xi1> to vector<16x256xi1>
    %75 = arith.select %74, %71, %72 : vector<16x256xi1>, vector<16x256xf32>
    %c96 = arith.constant 96 : index
    %c0_39 = arith.constant 0 : index
    %76 = vector.load %arg10[%c96, %c0_39] : memref<144x256xf32, #tpu.memory_space<vmem>>, vector<16x256xf32>
    tpu.vector_store %arg10[%c96, %c0_39], %75 {strides = array<i32>} : memref<144x256xf32, #tpu.memory_space<vmem>>, vector<16x256xf32>,
    %c0_40 = arith.constant 0 : index
    %c144 = arith.constant 144 : index
    %77 = vector.load %arg9[%c0_40, %c144] : memref<16x512xf32, #tpu.memory_space<vmem>>, vector<16x256xf32>
    %c112_41 = arith.constant 112 : index
    %c0_42 = arith.constant 0 : index
    %78 = vector.load %arg10[%c112_41, %c0_42] : memref<144x256xf32, #tpu.memory_space<vmem>>, vector<16x256xf32>
    tpu.vector_store %arg10[%c112_41, %c0_42], %77 {strides = array<i32>} : memref<144x256xf32, #tpu.memory_space<vmem>>, vector<16x256xf32>,
    %c0_43 = arith.constant 0 : index
    %c145 = arith.constant 145 : index
    %79 = vector.load %arg9[%c0_43, %c145] : memref<16x512xf32, #tpu.memory_space<vmem>>, vector<16x256xf32>
    %cst_44 = arith.constant 0.000000e+00 : f32
    %80 = vector.broadcast %cst_44 : f32 to vector<16x256xf32>
    %81 = vector.shape_cast %42 : vector<1x256xi1> to vector<1x256xi1>
    %82 = vector.broadcast %81 : vector<1x256xi1> to vector<16x256xi1>
    %83 = arith.select %82, %79, %80 : vector<16x256xi1>, vector<16x256xf32>
    %c128_45 = arith.constant 128 : index
    %c0_46 = arith.constant 0 : index
    %84 = vector.load %arg10[%c128_45, %c0_46] : memref<144x256xf32, #tpu.memory_space<vmem>>, vector<16x256xf32>
    tpu.vector_store %arg10[%c128_45, %c0_46], %83 {strides = array<i32>} : memref<144x256xf32, #tpu.memory_space<vmem>>, vector<16x256xf32>,
    %c0_47 = arith.constant 0 : index
    %c0_48 = arith.constant 0 : index
    %85 = vector.load %arg1[%c0_47, %c0_48] : memref<32x144xf32, #tpu.memory_space<vmem>>, vector<32x144xf32>
    %c0_49 = arith.constant 0 : index
    %c0_50 = arith.constant 0 : index
    %86 = vector.load %arg10[%c0_49, %c0_50] : memref<144x256xf32, #tpu.memory_space<vmem>>, vector<144x256xf32>
    %cst_51 = arith.constant dense<0.000000e+00> : vector<32x256xf32>
    %87 = tpu.matmul %85, %86, %cst_51 {dimension_numbers = #tpu.dot_dimension_numbers<[1], [0], [0], [1], [0, 0, 1, 1], [], []>} : vector<32x144xf32>, vector<144x256xf32>, vector<32x256xf32> -> vector<32x256xf32>
    %c0_52 = arith.constant 0 : index
    %c0_53 = arith.constant 0 : index
    %88 = vector.load %arg2[%c0_52, %c0_53] : memref<32x1xf32, #tpu.memory_space<vmem>>, vector<32x1xf32>
    %89 = vector.broadcast %88 : vector<32x1xf32> to vector<32x256xf32>
    %90 = arith.addf %87, %89 : vector<32x256xf32>
    %c0_54 = arith.constant 0 : index
    %c0_55 = arith.constant 0 : index
    %c0_56 = arith.constant 0 : index
    %91 = vector.load %arg6[%c0_54, %c0_55, %c0_56] : memref<1x32x256xf32, #tpu.memory_space<vmem>>, vector<1x32x256xf32>
    %92 = vector.shape_cast %91 : vector<1x32x256xf32> to vector<32x256xf32>
    %93 = vector.shape_cast %90 : vector<32x256xf32> to vector<1x32x256xf32>
    tpu.vector_store %arg6[%c0_54, %c0_55, %c0_56], %93 {strides = array<i32>} : memref<1x32x256xf32, #tpu.memory_space<vmem>>, vector<1x32x256xf32>,
    %94 = vector.extract_strided_slice %90 {offsets = [0, 0], sizes = [8, 256], strides = [1, 1]} : vector<32x256xf32> to vector<8x256xf32>
    %95 = arith.negf %94 : vector<8x256xf32>
    %96 = math.exp %95 : vector<8x256xf32>
    %cst_57 = arith.constant 1.000000e+00 : f32
    %97 = vector.broadcast %cst_57 : f32 to vector<8x256xf32>
    %98 = arith.addf %97, %96 : vector<8x256xf32>
    %99 = arith.divf %97, %98 : vector<8x256xf32>
    %100 = vector.extract_strided_slice %90 {offsets = [8, 0], sizes = [8, 256], strides = [1, 1]} : vector<32x256xf32> to vector<8x256xf32>
    %101 = arith.negf %100 : vector<8x256xf32>
    %102 = math.exp %101 : vector<8x256xf32>
    %cst_58 = arith.constant 1.000000e+00 : f32
    %103 = vector.broadcast %cst_58 : f32 to vector<8x256xf32>
    %104 = arith.addf %103, %102 : vector<8x256xf32>
    %105 = arith.divf %103, %104 : vector<8x256xf32>
    %106 = vector.extract_strided_slice %90 {offsets = [16, 0], sizes = [8, 256], strides = [1, 1]} : vector<32x256xf32> to vector<8x256xf32>
    %107 = arith.negf %106 : vector<8x256xf32>
    %108 = math.exp %107 : vector<8x256xf32>
    %cst_59 = arith.constant 1.000000e+00 : f32
    %109 = vector.broadcast %cst_59 : f32 to vector<8x256xf32>
    %110 = arith.addf %109, %108 : vector<8x256xf32>
    %111 = arith.divf %109, %110 : vector<8x256xf32>
    %112 = vector.extract_strided_slice %90 {offsets = [24, 0], sizes = [8, 256], strides = [1, 1]} : vector<32x256xf32> to vector<8x256xf32>
    %113 = math.tanh %112 : vector<8x256xf32>
    %c0_60 = arith.constant 0 : index
    %c0_61 = arith.constant 0 : index
    %c0_62 = arith.constant 0 : index
    %114 = vector.load %arg5[%c0_60, %c0_61, %c0_62] : memref<1x8x256xf32, #tpu.memory_space<vmem>>, vector<1x8x256xf32>
    %115 = vector.shape_cast %114 : vector<1x8x256xf32> to vector<8x256xf32>
    %116 = arith.mulf %105, %115 : vector<8x256xf32>
    %117 = arith.mulf %99, %113 : vector<8x256xf32>
    %118 = arith.addf %116, %117 : vector<8x256xf32>
    %119 = math.tanh %118 : vector<8x256xf32>
    %120 = arith.mulf %111, %119 : vector<8x256xf32>
    %c0_63 = arith.constant 0 : index
    %c0_64 = arith.constant 0 : index
    %c0_65 = arith.constant 0 : index
    %121 = vector.load %arg8[%c0_63, %c0_64, %c0_65] : memref<1x8x256xf32, #tpu.memory_space<vmem>>, vector<1x8x256xf32>
    %122 = vector.shape_cast %121 : vector<1x8x256xf32> to vector<8x256xf32>
    %123 = vector.shape_cast %118 : vector<8x256xf32> to vector<1x8x256xf32>
    tpu.vector_store %arg8[%c0_63, %c0_64, %c0_65], %123 {strides = array<i32>} : memref<1x8x256xf32, #tpu.memory_space<vmem>>, vector<1x8x256xf32>,
    %c0_66 = arith.constant 0 : index
    %c0_67 = arith.constant 0 : index
    %c0_68 = arith.constant 0 : index
    %124 = vector.load %arg7[%c0_66, %c0_67, %c0_68] : memref<1x8x256xf32, #tpu.memory_space<vmem>>, vector<1x8x256xf32>
    %125 = vector.shape_cast %124 : vector<1x8x256xf32> to vector<8x256xf32>
    %126 = vector.shape_cast %120 : vector<8x256xf32> to vector<1x8x256xf32>
    tpu.vector_store %arg7[%c0_66, %c0_67, %c0_68], %126 {strides = array<i32>} : memref<1x8x256xf32, #tpu.memory_space<vmem>>, vector<1x8x256xf32>,
    return
  }
  func.func @transform_0(%arg0: i32) -> (i32, i32) {
    %c0_i32 = arith.constant 0 : i32
    %c0_i32_0 = arith.constant 0 : i32
    %c0_i32_1 = arith.constant 0 : i32
    return %c0_i32, %c0_i32_0 : i32, i32
  }
  func.func @transform_1(%arg0: i32) -> (i32, i32) {
    %c0_i32 = arith.constant 0 : i32
    %c0_i32_0 = arith.constant 0 : i32
    %c0_i32_1 = arith.constant 0 : i32
    return %c0_i32, %c0_i32_0 : i32, i32
  }
  func.func @transform_2(%arg0: i32) -> (i32, i32, i32) {
    %c0_i32 = arith.constant 0 : i32
    %c0_i32_0 = arith.constant 0 : i32
    %c0_i32_1 = arith.constant 0 : i32
    return %arg0, %c0_i32, %c0_i32_0 : i32, i32, i32
  }
  func.func @transform_3(%arg0: i32) -> (i32, i32, i32) {
    %c0_i32 = arith.constant 0 : i32
    %c0_i32_0 = arith.constant 0 : i32
    %c0_i32_1 = arith.constant 0 : i32
    return %arg0, %c0_i32, %c0_i32_0 : i32, i32, i32
  }
  func.func @transform_4(%arg0: i32) -> (i32, i32, i32) {
    %c0_i32 = arith.constant 0 : i32
    %c0_i32_0 = arith.constant 0 : i32
    %c0_i32_1 = arith.constant 0 : i32
    return %arg0, %c0_i32, %c0_i32_0 : i32, i32, i32
  }
  func.func @transform_5(%arg0: i32) -> (i32, i32, i32) {
    %c0_i32 = arith.constant 0 : i32
    %c0_i32_0 = arith.constant 0 : i32
    %c0_i32_1 = arith.constant 0 : i32
    return %arg0, %c0_i32, %c0_i32_0 : i32, i32, i32
  }
  func.func @transform_6(%arg0: i32) -> (i32, i32, i32) {
    %c0_i32 = arith.constant 0 : i32
    %c0_i32_0 = arith.constant 0 : i32
    %c0_i32_1 = arith.constant 0 : i32
    return %arg0, %c0_i32, %c0_i32_0 : i32, i32, i32
  }
  func.func @transform_7(%arg0: i32) -> (i32, i32, i32) {
    %c0_i32 = arith.constant 0 : i32
    %c0_i32_0 = arith.constant 0 : i32
    %c0_i32_1 = arith.constant 0 : i32
    return %arg0, %c0_i32, %c0_i32_0 : i32, i32, i32
  }
}

</mosaic_0001>

<llo_original>
// kernel: tpu_custom_call.1
$region0: #{tpu_custom_call.1}
  #allocation0 [shape = 'u32[]', space=smem, size = 0x4, offset = 0x4, fixed_abs, tag = 'smem constant byte address 0x4 - core index']
  #allocation1 [shape = 'u32[144,128]{1,0:T(1,128)}', space=vmem, size = 0x12000, scoped, tag = 'internal scratch']
  #allocation2 [shape = 'f32[16,512]{1,0:T(8,128)}', space=vmem, size = 0x8000, scoped, tag = 'scratch operand']
  #allocation3 [shape = 'f32[144,256]{1,0:T(8,128)}', space=vmem, size = 0x24000, scoped, tag = 'scratch operand']
  %s0 = inlined_call_operand.hbm [shape: f32[32,144], index: 0, kind: input, shape index: {}]
  %s1 = inlined_call_operand.vmem [shape: f32[32,1], index: 1, kind: input, shape index: {}]
  %s2 = inlined_call_operand.hbm [shape: f32[2,4,256], index: 2, kind: input, shape index: {}]
  %s3 = inlined_call_operand.vmem [shape: f32[2,8,256], index: 3, kind: input, shape index: {}]
  %s4 = inlined_call_operand.hbm [shape: f32[2,8,256], index: 4, kind: input, shape index: {}]
  %s5 = inlined_call_operand.hbm [shape: f32[2,32,256], index: 5, kind: output, shape index: {0}]
  %s6 = inlined_call_operand.hbm [shape: f32[2,8,256], index: 6, kind: output, shape index: {1}]
  %s7 = inlined_call_operand.hbm [shape: f32[2,8,256], index: 7, kind: output, shape index: {2}]
  %8 = xla_tuple %s5, %s6, %s7
  %s9 = sld [smem:[#allocation0]]
  $region81: #{tpu_custom_call.1} parent=0
    _
  %s11 = ssub.s32 1, %s9
  %s12 = scalar_select 0, %s11, %s9
  $region1: #{tpu_custom_call.1} parent=0
    #allocation4 [shape = 'u8[32768]{0}', space=vmem, size = 0x8000, scoped, tag = 'input window, operand 0, single buffered']
    #allocation5 [shape = 's32[2]{0}', space=sflag, size = 0x8, scoped, tag = 'scoped memory for tpu_custom_call.1']
    #allocation6 [shape = 's32[2]{0}', space=sflag, size = 0x8, scoped, tag = 'scoped memory for tpu_custom_call.1']
    #allocation7 [shape = 'u8[8192]{0}', space=vmem, size = 0x2000, scoped, tag = 'input window, operand 2']
    #allocation8 [shape = 's32[2]{0}', space=sflag, size = 0x8, scoped, tag = 'scoped memory for tpu_custom_call.1']
    #allocation9 [shape = 'u8[16384]{0}', space=vmem, size = 0x4000, scoped, tag = 'input window, operand 4']
    #allocation10 [shape = 'u8[65536]{0}', space=vmem, size = 0x10000, scoped, tag = 'output window, operand 0']
    #allocation11 [shape = 'u8[16384]{0}', space=vmem, size = 0x4000, scoped, tag = 'output window, operand 1']
    #allocation12 [shape = 's32[2]{0}', space=sflag, size = 0x8, scoped, tag = 'scoped memory for tpu_custom_call.1']
    #allocation13 [shape = 'u8[16384]{0}', space=vmem, size = 0x4000, scoped, tag = 'output window, operand 2']
    %13 = vsyncpa [#allocation5], 0
    %14 = vsyncpa [#allocation8], 0
    %s15 = scalar_lea.sflag [#allocation8], 1
    %16 = vsyncpa %s15, 0
    %17 = vsyncpa [#allocation6], 0
    %s18 = scalar_lea.sflag [#allocation6], 1
    %19 = vsyncpa %s18, 0
    %20 = vsyncpa [#allocation12], 0
    %s21 = scalar_lea.sflag [#allocation12], 1
    %22 = vsyncpa %s21, 0
    loop: start=0, step=1, limit=4
    $region2: #{tpu_custom_call.1} parent=1 // loop_pre_header
      _
    $region3: #{tpu_custom_call.1} parent=1 // loop_header
      %s24 = sphi 0, %s28
      %p25 = scmp.ge.s32.totalorder %s24, 4
      %s32 = sphi 0, %s32
      %s34 = sphi 0, %s32
      %s35 = sphi 0, %s34
      %s49 = sphi 0, %s35
      %s53 = sphi 0, %s53
      %s55 = sphi 0, %s53
      %s56 = sphi 0, %s55
      %s70 = sphi 0, %s56
      %s76 = sphi 0, %s78
      %s79 = sphi 0, %s76
      %s80 = sphi 0, %s79
      %s96 = sphi 0, %s80
      %s102 = sphi 0, %s104
      %s105 = sphi 0, %s102
      %s106 = sphi 0, %s105
      %s122 = sphi 0, %s106
      %s128 = sphi 0, %s130
      %s131 = sphi 0, %s128
      %s132 = sphi 0, %s131
      %s148 = sphi 0, %s132
      %s154 = sphi 0, %s156
      %s157 = sphi 0, %s154
      %s158 = sphi 0, %s157
      %s174 = sphi 0, %s158
      %s180 = sphi 0, %s182
      %s183 = sphi 0, %s180
      %s184 = sphi 0, %s183
      %s200 = sphi 0, %s184
      %s206 = sphi 0, %s208
      %s209 = sphi 0, %s206
      %s210 = sphi 0, %s209
      %s226 = sphi 0, %s210
    $region4: #{tpu_custom_call.1} parent=1 // loop_header_branch
      %27 = sbr.rel (%p25) target = $region8
    $region5: #{tpu_custom_call.1} parent=1 // loop_body
      %s29 = ssub.s32 %s24, 1
      %s30 = ssub.s32 %s24, 2
      %s31 = sadd.s32 %s24, 1
      %s33 = sadd.s32 %s32, 1
      %p36 = scmp.eq.s32.totalorder %s24, 1
      %p37 = scmp.ne.s32.totalorder %s32, %s34
      %p38 = scmp.eq.s32.totalorder %s24, 0
      %p39 = por %p37, %p38
      %p40 = scmp.ne.s32.totalorder %s32, %s34
      %p41 = scmp.eq.s32.totalorder %s29, 1
      %p42 = por %p40, %p41
      %p43 = scmp.ne.s32.totalorder %s34, %s35
      %p44 = scmp.eq.s32.totalorder %s29, 0
      %p45 = por %p43, %p44
      %p46 = scmp.ne.s32.totalorder %s34, %s35
      %p47 = scmp.eq.s32.totalorder %s30, 1
      %p48 = por %p46, %p47
      %p50 = scmp.ne.s32.totalorder %s35, %s49
      %p51 = scmp.eq.s32.totalorder %s30, 0
      %p52 = por %p50, %p51
      %s54 = sadd.s32 %s53, 1
      %p57 = scmp.eq.s32.totalorder %s24, 1
      %p58 = scmp.ne.s32.totalorder %s53, %s55
      %p59 = scmp.eq.s32.totalorder %s24, 0
      %p60 = por %p58, %p59
      %p61 = scmp.ne.s32.totalorder %s53, %s55
      %p62 = scmp.eq.s32.totalorder %s29, 1
      %p63 = por %p61, %p62
      %p64 = scmp.ne.s32.totalorder %s55, %s56
      %p65 = scmp.eq.s32.totalorder %s29, 0
      %p66 = por %p64, %p65
      %p67 = scmp.ne.s32.totalorder %s55, %s56
      %p68 = scmp.eq.s32.totalorder %s30, 1
      %p69 = por %p67, %p68
      %p71 = scmp.ne.s32.totalorder %s56, %s70
      %p72 = scmp.eq.s32.totalorder %s30, 0
      %p73 = por %p71, %p72
      %s74 = ssub.s32 %s24, %s31
      %p75 = scmp.eq.s32.totalorder %s74, 0
      %s77 = sadd.s32 %s76, 1
      %s78 = scalar_select %p75, %s76, %s77
      %p81 = pneg %p75
      %p82 = scmp.eq.s32.totalorder %s24, 1
      %p83 = por %p81, %p82
      %p84 = scmp.ne.s32.totalorder %s76, %s79
      %p85 = scmp.eq.s32.totalorder %s24, 0
      %p86 = por %p84, %p85
      %p87 = scmp.ne.s32.totalorder %s76, %s79
      %p88 = scmp.eq.s32.totalorder %s29, 1
      %p89 = por %p87, %p88
      %p90 = scmp.ne.s32.totalorder %s79, %s80
      %p91 = scmp.eq.s32.totalorder %s29, 0
      %p92 = por %p90, %p91
      %p93 = scmp.ne.s32.totalorder %s79, %s80
      %p94 = scmp.eq.s32.totalorder %s30, 1
      %p95 = por %p93, %p94
      %p97 = scmp.ne.s32.totalorder %s80, %s96
      %p98 = scmp.eq.s32.totalorder %s30, 0
      %p99 = por %p97, %p98
      %s100 = ssub.s32 %s24, %s31
      %p101 = scmp.eq.s32.totalorder %s100, 0
      %s103 = sadd.s32 %s102, 1
      %s104 = scalar_select %p101, %s102, %s103
      %p107 = pneg %p101
      %p108 = scmp.eq.s32.totalorder %s24, 1
      %p109 = por %p107, %p108
      %p110 = scmp.ne.s32.totalorder %s102, %s105
      %p111 = scmp.eq.s32.totalorder %s24, 0
      %p112 = por %p110, %p111
      %p113 = scmp.ne.s32.totalorder %s102, %s105
      %p114 = scmp.eq.s32.totalorder %s29, 1
      %p115 = por %p113, %p114
      %p116 = scmp.ne.s32.totalorder %s105, %s106
      %p117 = scmp.eq.s32.totalorder %s29, 0
      %p118 = por %p116, %p117
      %p119 = scmp.ne.s32.totalorder %s105, %s106
      %p120 = scmp.eq.s32.totalorder %s30, 1
      %p121 = por %p119, %p120
      %p123 = scmp.ne.s32.totalorder %s106, %s122
      %p124 = scmp.eq.s32.totalorder %s30, 0
      %p125 = por %p123, %p124
      %s126 = ssub.s32 %s24, %s31
      %p127 = scmp.eq.s32.totalorder %s126, 0
      %s129 = sadd.s32 %s128, 1
      %s130 = scalar_select %p127, %s128, %s129
      %p133 = pneg %p127
      %p134 = scmp.eq.s32.totalorder %s24, 1
      %p135 = por %p133, %p134
      %p136 = scmp.ne.s32.totalorder %s128, %s131
      %p137 = scmp.eq.s32.totalorder %s24, 0
      %p138 = por %p136, %p137
      %p139 = scmp.ne.s32.totalorder %s128, %s131
      %p140 = scmp.eq.s32.totalorder %s29, 1
      %p141 = por %p139, %p140
      %p142 = scmp.ne.s32.totalorder %s131, %s132
      %p143 = scmp.eq.s32.totalorder %s29, 0
      %p144 = por %p142, %p143
      %p145 = scmp.ne.s32.totalorder %s131, %s132
      %p146 = scmp.eq.s32.totalorder %s30, 1
      %p147 = por %p145, %p146
      %p149 = scmp.ne.s32.totalorder %s132, %s148
      %p150 = scmp.eq.s32.totalorder %s30, 0
      %p151 = por %p149, %p150
      %s152 = ssub.s32 %s24, %s31
      %p153 = scmp.eq.s32.totalorder %s152, 0
      %s155 = sadd.s32 %s154, 1
      %s156 = scalar_select %p153, %s154, %s155
      %p159 = pneg %p153
      %p160 = scmp.eq.s32.totalorder %s24, 1
      %p161 = por %p159, %p160
      %p162 = scmp.ne.s32.totalorder %s154, %s157
      %p163 = scmp.eq.s32.totalorder %s24, 0
      %p164 = por %p162, %p163
      %p165 = scmp.ne.s32.totalorder %s154, %s157
      %p166 = scmp.eq.s32.totalorder %s29, 1
      %p167 = por %p165, %p166
      %p168 = scmp.ne.s32.totalorder %s157, %s158
      %p169 = scmp.eq.s32.totalorder %s29, 0
      %p170 = por %p168, %p169
      %p171 = scmp.ne.s32.totalorder %s157, %s158
      %p172 = scmp.eq.s32.totalorder %s30, 1
      %p173 = por %p171, %p172
      %p175 = scmp.ne.s32.totalorder %s158, %s174
      %p176 = scmp.eq.s32.totalorder %s30, 0
      %p177 = por %p175, %p176
      %s178 = ssub.s32 %s24, %s31
      %p179 = scmp.eq.s32.totalorder %s178, 0
      %s181 = sadd.s32 %s180, 1
      %s182 = scalar_select %p179, %s180, %s181
      %p185 = pneg %p179
      %p186 = scmp.eq.s32.totalorder %s24, 1
      %p187 = por %p185, %p186
      %p188 = scmp.ne.s32.totalorder %s180, %s183
      %p189 = scmp.eq.s32.totalorder %s24, 0
      %p190 = por %p188, %p189
      %p191 = scmp.ne.s32.totalorder %s180, %s183
      %p192 = scmp.eq.s32.totalorder %s29, 1
      %p193 = por %p191, %p192
      %p194 = scmp.ne.s32.totalorder %s183, %s184
      %p195 = scmp.eq.s32.totalorder %s29, 0
      %p196 = por %p194, %p195
      %p197 = scmp.ne.s32.totalorder %s183, %s184
      %p198 = scmp.eq.s32.totalorder %s30, 1
      %p199 = por %p197, %p198
      %p201 = scmp.ne.s32.totalorder %s184, %s200
      %p202 = scmp.eq.s32.totalorder %s30, 0
      %p203 = por %p201, %p202
      %s204 = ssub.s32 %s24, %s31
      %p205 = scmp.eq.s32.totalorder %s204, 0
      %s207 = sadd.s32 %s206, 1
      %s208 = scalar_select %p205, %s206, %s207
      %p211 = pneg %p205
      %p212 = scmp.eq.s32.totalorder %s24, 1
      %p213 = por %p211, %p212
      %p214 = scmp.ne.s32.totalorder %s206, %s209
      %p215 = scmp.eq.s32.totalorder %s24, 0
      %p216 = por %p214, %p215
      %p217 = scmp.ne.s32.totalorder %s206, %s209
      %p218 = scmp.eq.s32.totalorder %s29, 1
      %p219 = por %p217, %p218
      %p220 = scmp.ne.s32.totalorder %s209, %s210
      %p221 = scmp.eq.s32.totalorder %s29, 0
      %p222 = por %p220, %p221
      %p223 = scmp.ne.s32.totalorder %s209, %s210
      %p224 = scmp.eq.s32.totalorder %s30, 1
      %p225 = por %p223, %p224
      %p227 = scmp.ne.s32.totalorder %s210, %s226
      %p228 = scmp.eq.s32.totalorder %s30, 0
      %p229 = por %p227, %p228
      %p230 = scmp.le.s32.totalorder 1, %s24
      %p231 = scmp.lt.s32.totalorder %s24, 3
      %p232 = pnand %p230, %p231
      %p233 = pneg %p232
      // Predicated region
      $region9: #{tpu_custom_call.1} parent=5 // pred_check
        _
      $region10: #{tpu_custom_call.1} parent=5 // pred_check_branch
        %235 = sbr.rel (%p232) target = $region12
      $region11: #{tpu_custom_call.1} parent=5 // pred_region
        %s236 = ssub.s32 %s24, 1
        // Predicated region
        $region13: #{tpu_custom_call.1} parent=11 // pred_check
          %p237 = pneg %p45
        $region14: #{tpu_custom_call.1} parent=11 // pred_check_branch
          %239 = sbr.rel (%p237) target = $region16
        $region15: #{tpu_custom_call.1} parent=11 // pred_region
          %s241 = ssub.s32 1024, 1024
          %242 = vsyncadd [#allocation5], %s241
          %s243 = sshll.u32 [#allocation4], 4
          %s244 = int_to_ptr.vmem [resolvable:$true] %s243
          %249 = dma.hbm_to_vmem [thread:$0]  %s0, 1024, %s244, [#allocation5], 256, 256, 16
        $region16: #{tpu_custom_call.1} parent=11 // pred_fallthru
          _
        // Predicated region
        $region17: #{tpu_custom_call.1} parent=11 // pred_check
          %p250 = pneg %p66
        $region18: #{tpu_custom_call.1} parent=11 // pred_check_branch
          %252 = sbr.rel (%p250) target = $region20
        $region19: #{tpu_custom_call.1} parent=11 // pred_region
          _
        $region20: #{tpu_custom_call.1} parent=11 // pred_fallthru
          _
      $region12: #{tpu_custom_call.1} parent=5 // pred_fallthru
        _
      %p253 = scmp.lt.s32.totalorder %s24, 2
      // Predicated region
      $region21: #{tpu_custom_call.1} parent=5 // pred_check
        %p254 = pneg %p253
      $region22: #{tpu_custom_call.1} parent=5 // pred_check_branch
        %256 = sbr.rel (%p254) target = $region24
      $region23: #{tpu_custom_call.1} parent=5 // pred_region
        // Predicated region
        $region25: #{tpu_custom_call.1} parent=23 // pred_check
          %p257 = pneg %p86
        $region26: #{tpu_custom_call.1} parent=23 // pred_check_branch
          %259 = sbr.rel (%p257) target = $region28
        $region27: #{tpu_custom_call.1} parent=23 // pred_region
          %s260 = sand.u32 %s24, 1
          %s261 = scalar_lea.sflag [#allocation8], %s260
          %s262 = sand.u32 %s76, 1
          %s263 = smul.addr %s262, 8
          %s264 = scalar_lea.vmem [#allocation7], %s263
          %s266 = ssub.s32 128, 128
          %267 = vsyncadd %s261, %s266
          %s268 = smul.addr %s24, 2
          %s269 = smul.addr %s268, 64
          %s270 = scalar_lea.hbm %s2, %s269
          %s272 = sshll.u32 %s264, 4
          %s273 = int_to_ptr.vmem [resolvable:$true] %s272
          %275 = dma.hbm_to_vmem [thread:$0]  %s270, 128, %s273, %s261
        $region28: #{tpu_custom_call.1} parent=23 // pred_fallthru
          _
        // Predicated region
        $region29: #{tpu_custom_call.1} parent=23 // pred_check
          %p276 = pneg %p112
        $region30: #{tpu_custom_call.1} parent=23 // pred_check_branch
          %278 = sbr.rel (%p276) target = $region32
        $region31: #{tpu_custom_call.1} parent=23 // pred_region
          %p279 = scmp.lt.s32.totalorder %s24, 1
          %s280 = scalar_select %p279, %s24, 1
          %s281 = smul.addr %s280, 2
          %s282 = smul.addr %s281, 8
          %s283 = scalar_lea.vmem %s3, %s282
        $region32: #{tpu_custom_call.1} parent=23 // pred_fallthru
          _
        // Predicated region
        $region33: #{tpu_custom_call.1} parent=23 // pred_check
          %p284 = pneg %p138
        $region34: #{tpu_custom_call.1} parent=23 // pred_check_branch
          %286 = sbr.rel (%p284) target = $region36
        $region35: #{tpu_custom_call.1} parent=23 // pred_region
          %s287 = sand.u32 %s24, 1
          %s288 = scalar_lea.sflag [#allocation8], %s287
          %s289 = sand.u32 %s128, 1
          %s290 = smul.addr %s289, 16
          %s291 = scalar_lea.vmem [#allocation9], %s290
          %s293 = ssub.s32 256, 256
          %294 = vsyncadd %s288, %s293
          %s295 = smul.addr %s24, 2
          %s296 = smul.addr %s295, 128
          %s297 = scalar_lea.hbm %s4, %s296
          %s299 = sshll.u32 %s291, 4
          %s300 = int_to_ptr.vmem [resolvable:$true] %s299
          %302 = dma.hbm_to_vmem [thread:$0]  %s297, 256, %s300, %s288
        $region36: #{tpu_custom_call.1} parent=23 // pred_fallthru
          _
      $region24: #{tpu_custom_call.1} parent=5 // pred_fallthru
        _
      %p303 = scmp.le.s32.totalorder 1, %s24
      %p304 = scmp.lt.s32.totalorder %s24, 3
      %p305 = pnand %p303, %p304
      %p306 = pneg %p305
      // Predicated region
      $region37: #{tpu_custom_call.1} parent=5 // pred_check
        _
      $region38: #{tpu_custom_call.1} parent=5 // pred_check_branch
        %308 = sbr.rel (%p305) target = $region40
      $region39: #{tpu_custom_call.1} parent=5 // pred_region
        %s309 = ssub.s32 %s24, 1
        // Predicated region
        $region41: #{tpu_custom_call.1} parent=39 // pred_check
          %p310 = pneg %p45
        $region42: #{tpu_custom_call.1} parent=39 // pred_check_branch
          %312 = sbr.rel (%p310) target = $region44
        $region43: #{tpu_custom_call.1} parent=39 // pred_region
          %313 = dma.done [#allocation5], 1024
        $region44: #{tpu_custom_call.1} parent=39 // pred_fallthru
          _
        %s314 = sand.u32 %s29, 1
        %s315 = scalar_lea.sflag [#allocation8], %s314
        %s316 = sand.u32 %s79, 1
        %s317 = smul.addr %s316, 8
        %s318 = scalar_lea.vmem [#allocation7], %s317
        // Predicated region
        $region45: #{tpu_custom_call.1} parent=39 // pred_check
          %p319 = pneg %p92
        $region46: #{tpu_custom_call.1} parent=39 // pred_check_branch
          %321 = sbr.rel (%p319) target = $region48
        $region47: #{tpu_custom_call.1} parent=39 // pred_region
          %322 = dma.done %s315, 128
        $region48: #{tpu_custom_call.1} parent=39 // pred_fallthru
          _
        %s323 = sand.u32 %s29, 1
        %s324 = scalar_lea.sflag [#allocation8], %s323
        %s325 = sand.u32 %s131, 1
        %s326 = smul.addr %s325, 16
        %s327 = scalar_lea.vmem [#allocation9], %s326
        // Predicated region
        $region49: #{tpu_custom_call.1} parent=39 // pred_check
          %p328 = pneg %p144
        $region50: #{tpu_custom_call.1} parent=39 // pred_check_branch
          %330 = sbr.rel (%p328) target = $region52
        $region51: #{tpu_custom_call.1} parent=39 // pred_region
          %331 = dma.done %s324, 256
        $region52: #{tpu_custom_call.1} parent=39 // pred_fallthru
          _
        %p332 = pneg %p45
        %p333 = pneg %p42
        %p334 = pneg %p66
        %p335 = pneg %p63
        %s336 = sand.u32 %s29, 1
        %s337 = scalar_lea.sflag [#allocation8], %s336
        %s338 = sand.u32 %s79, 1
        %s339 = smul.addr %s338, 8
        %s340 = scalar_lea.vmem [#allocation7], %s339
        %p341 = pneg %p92
        %p342 = pneg %p89
        %p343 = scmp.lt.s32.totalorder %s29, 1
        %s344 = scalar_select %p343, %s29, 1
        %s345 = smul.addr %s344, 2
        %s346 = smul.addr %s345, 8
        %s347 = scalar_lea.vmem %s3, %s346
        %p348 = pneg %p118
        %p349 = pneg %p115
        %s350 = sand.u32 %s29, 1
        %s351 = scalar_lea.sflag [#allocation8], %s350
        %s352 = sand.u32 %s131, 1
        %s353 = smul.addr %s352, 16
        %s354 = scalar_lea.vmem [#allocation9], %s353
        %p355 = pneg %p144
        %p356 = pneg %p141
        %p357 = pneg %p170
        %p358 = pneg %p167
        %s359 = sand.u32 %s157, 1
        %s360 = scalar_lea.sflag [#allocation6], %s359
        %s361 = sand.u32 %s157, 1
        %s362 = smul.addr %s361, 64
        %s363 = scalar_lea.vmem [#allocation10], %s362
        %p364 = pneg %p196
        %p365 = pneg %p193
        %s366 = sand.u32 %s29, 1
        %s367 = scalar_lea.sflag [#allocation12], %s366
        %s368 = sand.u32 %s183, 1
        %s369 = smul.addr %s368, 16
        %s370 = scalar_lea.vmem [#allocation11], %s369
        %p371 = pneg %p222
        %p372 = pneg %p219
        %s373 = sand.u32 %s29, 1
        %s374 = scalar_lea.sflag [#allocation12], %s373
        %s375 = sand.u32 %s209, 1
        %s376 = smul.addr %s375, 16
        %s377 = scalar_lea.vmem [#allocation13], %s376
        %p378 = scmp.lt.s32.totalorder %s29, 1
        %s379 = scalar_select %p378, %s29, 1
        %s380 = smul.addr %s379, 2
        %s381 = smul.addr %s380, 8
        %s382 = scalar_lea.vmem %s3, %s381
        %383 = vst [vmem:[#allocation2] sm:$0xff] 0.0
        %384 = vst [vmem:[#allocation2 + $0x8] sm:$0xff] 0.0
        %385 = vst [vmem:[#allocation2 + $0x10] sm:$0xff] 0.0
        %386 = vst [vmem:[#allocation2 + $0x18] sm:$0xff] 0.0
        %387 = vst [vmem:[#allocation2 + $0x20] sm:$0xff] 0.0
        %388 = vst [vmem:[#allocation2 + $0x28] sm:$0xff] 0.0
        %389 = vst [vmem:[#allocation2 + $0x30] sm:$0xff] 0.0
        %390 = vst [vmem:[#allocation2 + $0x38] sm:$0xff] 0.0
        %v391 = vld [vmem:[%s382] sm:$0xff]
        %v392 = vld [vmem:[%s382 + $0x8] sm:$0xff]
        %393 = vst [vmem:[#allocation2 + $0x8] sm:$0xff] %v391
        %394 = vst [vmem:[#allocation2 + $0x10] sm:$0xff] %v392
        %v395 = vld [vmem:[%s318] sm:$0xff]
        %v397 = vcombine.high %v395, %v395
        %399 = vst [vmem:[#allocation2 + $0x28] sm:$0xf] %v395
        %400 = vst [vmem:[#allocation2 + $0x30] sm:$0xf] %v397
        %v401 = vlaneseq
        %v402 = vand.u32 %v401, 127
        %v403 = vadd.s32 %v402, 128
        %vm404 = vcmp.lt.s32.totalorder %v402, 0
        %v405 = vsub.s32 0, %v402
        %v406 = vsel %vm404, %v405, %v402
        %v407 = vshrl.u32 %v406, 4
        %v408 = vand.u32 %v406, 15
        %v409 = vsub.s32 0, %v408
        %v410 = vsel %vm404, %v409, %v408
        %vm411 = vcmp.lt.s32.totalorder %v403, 0
        %v412 = vsub.s32 0, %v403
        %v413 = vsel %vm411, %v412, %v403
        %v414 = vshrl.u32 %v413, 4
        %v415 = vand.u32 %v413, 15
        %v416 = vsub.s32 0, %v415
        %v417 = vsel %vm411, %v416, %v415
        %vm418 = vcmp.ne.s32.totalorder %v410, 0
        %vm419 = vcmp.ne.s32.totalorder %v417, 0
        %vm420 = vcmp.lt.s32.totalorder %v410, 0
        %vm421 = vcmp.lt.s32.totalorder %v417, 0
        %vm422 = vmand %vm420, %vm418
        %vm423 = vmand %vm421, %vm419
        %v424 = vadd.s32 %v410, 16
        %v425 = vadd.s32 %v417, 16
        %v426 = vsel %vm422, %v424, %v410
        %v427 = vsel %vm423, %v425, %v417
        %v428 = vadd.s32 %v426, 4294967295
        %v429 = vadd.s32 %v427, 4294967295
        %vm430 = vcmp.ge.s32.totalorder %v428, 0
        %vm431 = vcmp.ge.s32.totalorder %v429, 0
        %vm432 = vcmp.lt.s32.totalorder %v428, 16
        %vm433 = vcmp.lt.s32.totalorder %v429, 16
        %vm434 = vmand %vm430, %vm432
        %vm435 = vmand %vm431, %vm433
        %v436 = vadd.s32 %v426, 1
        %v437 = vadd.s32 %v427, 1
        %vm438 = vcmp.ge.s32.totalorder %v436, 0
        %vm439 = vcmp.ge.s32.totalorder %v437, 0
        %vm440 = vcmp.lt.s32.totalorder %v436, 16
        %vm441 = vcmp.lt.s32.totalorder %v437, 16
        %vm442 = vmand %vm438, %vm440
        %vm443 = vmand %vm439, %vm441
        %v444 = vld [vmem:[#allocation2] sm:$0xff]
        %v445 = vld [vmem:[#allocation2 + $0x8] sm:$0xff]
        %v446 = vld [vmem:[#allocation2 + $0x10] sm:$0xff]
        %v447 = vld [vmem:[#allocation2 + $0x20] sm:$0xff]
        %v448 = vld [vmem:[#allocation2 + $0x28] sm:$0xff]
        %v449 = vld [vmem:[#allocation2 + $0x30] sm:$0xff]
        %v450 = vsel %vm434, 1, 0
        %v451 = vsel %vm435, 1, 0
        %vm452 = vcmp.eq.s32.totalorder %v450, 1
        %vm453 = vcmp.eq.s32.totalorder %v451, 1
        %460 = vrot.lane.b32.xlu0 %v444, 17
        %v461 = vpop.permute.xlu0 %460
        %462 = vrot.lane.b32.xlu0 %v445, 17
        %v463 = vpop.permute.xlu0 %462
        %464 = vrot.lane.b32.xlu0 %v446, 17
        %v465 = vpop.permute.xlu0 %464
        %466 = vrot.lane.b32.xlu0 %v447, 17
        %v467 = vpop.permute.xlu0 %466
        %468 = vrot.lane.b32.xlu0 %v448, 17
        %v469 = vpop.permute.xlu0 %468
        %470 = vrot.lane.b32.xlu0 %v449, 17
        %v471 = vpop.permute.xlu0 %470
        %vm472 = vcmask 138240
        %v473 = vsel %vm472, %v461, %v463
        %v474 = vsel %vm472, %v463, %v465
        %v475 = vsel %vm472, %v467, %v469
        %v476 = vsel %vm472, %v469, %v471
        %v481 = vsel %vm452, %v473, 0.0
        %v482 = vsel %vm453, %v474, 0.0
        %v483 = vsel %vm452, %v475, 0.0
        %v484 = vsel %vm453, %v476, 0.0
        %485 = vst [vmem:[#allocation3] sm:$0xff] %v481
        %486 = vst [vmem:[#allocation3 + $0x8] sm:$0xff] %v482
        %487 = vst [vmem:[#allocation3 + $0x10] sm:$0xff] %v483
        %488 = vst [vmem:[#allocation3 + $0x18] sm:$0xff] %v484
        %v489 = vld [vmem:[#allocation2] sm:$0xff]
        %v490 = vld [vmem:[#allocation2 + $0x8] sm:$0xff]
        %v491 = vld [vmem:[#allocation2 + $0x10] sm:$0xff]
        %v492 = vld [vmem:[#allocation2 + $0x20] sm:$0xff]
        %v493 = vld [vmem:[#allocation2 + $0x28] sm:$0xff]
        %v494 = vld [vmem:[#allocation2 + $0x30] sm:$0xff]
        %501 = vrot.lane.b32.xlu0 %v489, 16
        %v502 = vpop.permute.xlu0 %501
        %503 = vrot.lane.b32.xlu0 %v490, 16
        %v504 = vpop.permute.xlu0 %503
        %505 = vrot.lane.b32.xlu0 %v491, 16
        %v506 = vpop.permute.xlu0 %505
        %507 = vrot.lane.b32.xlu0 %v492, 16
        %v508 = vpop.permute.xlu0 %507
        %509 = vrot.lane.b32.xlu0 %v493, 16
        %v510 = vpop.permute.xlu0 %509
        %511 = vrot.lane.b32.xlu0 %v494, 16
        %v512 = vpop.permute.xlu0 %511
        %vm513 = vcmask 130048
        %v514 = vsel %vm513, %v502, %v504
        %v515 = vsel %vm513, %v504, %v506
        %v516 = vsel %vm513, %v508, %v510
        %v517 = vsel %vm513, %v510, %v512
        %522 = vst [vmem:[#allocation3 + $0x20] sm:$0xff] %v514
        %523 = vst [vmem:[#allocation3 + $0x28] sm:$0xff] %v515
        %524 = vst [vmem:[#allocation3 + $0x30] sm:$0xff] %v516
        %525 = vst [vmem:[#allocation3 + $0x38] sm:$0xff] %v517
        %v526 = vld [vmem:[#allocation2] sm:$0xff]
        %v527 = vld [vmem:[#allocation2 + $0x8] sm:$0xff]
        %v528 = vld [vmem:[#allocation2 + $0x10] sm:$0xff]
        %v529 = vld [vmem:[#allocation2 + $0x20] sm:$0xff]
        %v530 = vld [vmem:[#allocation2 + $0x28] sm:$0xff]
        %v531 = vld [vmem:[#allocation2 + $0x30] sm:$0xff]
        %v532 = vsel %vm442, 1, 0
        %v533 = vsel %vm443, 1, 0
        %vm534 = vcmp.eq.s32.totalorder %v532, 1
        %vm535 = vcmp.eq.s32.totalorder %v533, 1
        %542 = vrot.lane.b32.xlu0 %v526, 15
        %v543 = vpop.permute.xlu0 %542
        %544 = vrot.lane.b32.xlu0 %v527, 15
        %v545 = vpop.permute.xlu0 %544
        %546 = vrot.lane.b32.xlu0 %v528, 15
        %v547 = vpop.permute.xlu0 %546
        %548 = vrot.lane.b32.xlu0 %v529, 15
        %v549 = vpop.permute.xlu0 %548
        %550 = vrot.lane.b32.xlu0 %v530, 15
        %v551 = vpop.permute.xlu0 %550
        %552 = vrot.lane.b32.xlu0 %v531, 15
        %v553 = vpop.permute.xlu0 %552
        %vm554 = vcmask 121856
        %v555 = vsel %vm554, %v543, %v545
        %v556 = vsel %vm554, %v545, %v547
        %v557 = vsel %vm554, %v549, %v551
        %v558 = vsel %vm554, %v551, %v553
        %v563 = vsel %vm534, %v555, 0.0
        %v564 = vsel %vm535, %v556, 0.0
        %v565 = vsel %vm534, %v557, 0.0
        %v566 = vsel %vm535, %v558, 0.0
        %567 = vst [vmem:[#allocation3 + $0x40] sm:$0xff] %v563
        %568 = vst [vmem:[#allocation3 + $0x48] sm:$0xff] %v564
        %569 = vst [vmem:[#allocation3 + $0x50] sm:$0xff] %v565
        %570 = vst [vmem:[#allocation3 + $0x58] sm:$0xff] %v566
        %v571 = vld [vmem:[#allocation2] sm:$0xff]
        %v572 = vld [vmem:[#allocation2 + $0x8] sm:$0xff]
        %v573 = vld [vmem:[#allocation2 + $0x10] sm:$0xff]
        %v574 = vld [vmem:[#allocation2 + $0x20] sm:$0xff]
        %v575 = vld [vmem:[#allocation2 + $0x28] sm:$0xff]
        %v576 = vld [vmem:[#allocation2 + $0x30] sm:$0xff]
        %583 = vrot.lane.b32.xlu0 %v571, 1
        %v584 = vpop.permute.xlu0 %583
        %585 = vrot.lane.b32.xlu0 %v572, 1
        %v586 = vpop.permute.xlu0 %585
        %587 = vrot.lane.b32.xlu0 %v573, 1
        %v588 = vpop.permute.xlu0 %587
        %589 = vrot.lane.b32.xlu0 %v574, 1
        %v590 = vpop.permute.xlu0 %589
        %591 = vrot.lane.b32.xlu0 %v575, 1
        %v592 = vpop.permute.xlu0 %591
        %593 = vrot.lane.b32.xlu0 %v576, 1
        %v594 = vpop.permute.xlu0 %593
        %vm595 = vcmask 7168
        %v596 = vsel %vm595, %v584, %v586
        %v597 = vsel %vm595, %v586, %v588
        %v598 = vsel %vm595, %v590, %v592
        %v599 = vsel %vm595, %v592, %v594
        %v604 = vsel %vm452, %v596, 0.0
        %v605 = vsel %vm453, %v597, 0.0
        %v606 = vsel %vm452, %v598, 0.0
        %v607 = vsel %vm453, %v599, 0.0
        %608 = vst [vmem:[#allocation3 + $0x60] sm:$0xff] %v604
        %609 = vst [vmem:[#allocation3 + $0x68] sm:$0xff] %v605
        %610 = vst [vmem:[#allocation3 + $0x70] sm:$0xff] %v606
        %611 = vst [vmem:[#allocation3 + $0x78] sm:$0xff] %v607
        %v612 = vld [vmem:[#allocation2 + $0x8] sm:$0xff]
        %v613 = vld [vmem:[#allocation2 + $0x10] sm:$0xff]
        %v614 = vld [vmem:[#allocation2 + $0x28] sm:$0xff]
        %v615 = vld [vmem:[#allocation2 + $0x30] sm:$0xff]
        %616 = vst [vmem:[#allocation3 + $0x80] sm:$0xff] %v612
        %617 = vst [vmem:[#allocation3 + $0x88] sm:$0xff] %v613
        %618 = vst [vmem:[#allocation3 + $0x90] sm:$0xff] %v614
        %619 = vst [vmem:[#allocation3 + $0x98] sm:$0xff] %v615
        %v620 = vld [vmem:[#allocation2 + $0x8] sm:$0xff]
        %v621 = vld [vmem:[#allocation2 + $0x10] sm:$0xff]
        %v622 = vld [vmem:[#allocation2 + $0x18] sm:$0xff]
        %v623 = vld [vmem:[#allocation2 + $0x28] sm:$0xff]
        %v624 = vld [vmem:[#allocation2 + $0x30] sm:$0xff]
        %v625 = vld [vmem:[#allocation2 + $0x38] sm:$0xff]
        %632 = vrot.lane.b32.xlu0 %v620, 127
        %v633 = vpop.permute.xlu0 %632
        %634 = vrot.lane.b32.xlu0 %v621, 127
        %v635 = vpop.permute.xlu0 %634
        %636 = vrot.lane.b32.xlu0 %v622, 127
        %v637 = vpop.permute.xlu0 %636
        %638 = vrot.lane.b32.xlu0 %v623, 127
        %v639 = vpop.permute.xlu0 %638
        %640 = vrot.lane.b32.xlu0 %v624, 127
        %v641 = vpop.permute.xlu0 %640
        %642 = vrot.lane.b32.xlu0 %v625, 127
        %v643 = vpop.permute.xlu0 %642
        %vm644 = vcmask 1039360
        %v645 = vsel %vm644, %v633, %v635
        %v646 = vsel %vm644, %v635, %v637
        %v647 = vsel %vm644, %v639, %v641
        %v648 = vsel %vm644, %v641, %v643
        %v653 = vsel %vm534, %v645, 0.0
        %v654 = vsel %vm535, %v646, 0.0
        %v655 = vsel %vm534, %v647, 0.0
        %v656 = vsel %vm535, %v648, 0.0
        %657 = vst [vmem:[#allocation3 + $0xa0] sm:$0xff] %v653
        %658 = vst [vmem:[#allocation3 + $0xa8] sm:$0xff] %v654
        %659 = vst [vmem:[#allocation3 + $0xb0] sm:$0xff] %v655
        %660 = vst [vmem:[#allocation3 + $0xb8] sm:$0xff] %v656
        %v661 = vld [vmem:[#allocation2 + $0x8] sm:$0xff]
        %v662 = vld [vmem:[#allocation2 + $0x10] sm:$0xff]
        %v663 = vld [vmem:[#allocation2 + $0x18] sm:$0xff]
        %v664 = vld [vmem:[#allocation2 + $0x28] sm:$0xff]
        %v665 = vld [vmem:[#allocation2 + $0x30] sm:$0xff]
        %v666 = vld [vmem:[#allocation2 + $0x38] sm:$0xff]
        %673 = vrot.lane.b32.xlu0 %v661, 113
        %v674 = vpop.permute.xlu0 %673
        %675 = vrot.lane.b32.xlu0 %v662, 113
        %v676 = vpop.permute.xlu0 %675
        %677 = vrot.lane.b32.xlu0 %v663, 113
        %v678 = vpop.permute.xlu0 %677
        %679 = vrot.lane.b32.xlu0 %v664, 113
        %v680 = vpop.permute.xlu0 %679
        %681 = vrot.lane.b32.xlu0 %v665, 113
        %v682 = vpop.permute.xlu0 %681
        %683 = vrot.lane.b32.xlu0 %v666, 113
        %v684 = vpop.permute.xlu0 %683
        %vm685 = vcmask 924672
        %v686 = vsel %vm685, %v674, %v676
        %v687 = vsel %vm685, %v676, %v678
        %v688 = vsel %vm685, %v680, %v682
        %v689 = vsel %vm685, %v682, %v684
        %v694 = vsel %vm452, %v686, 0.0
        %v695 = vsel %vm453, %v687, 0.0
        %v696 = vsel %vm452, %v688, 0.0
        %v697 = vsel %vm453, %v689, 0.0
        %698 = vst [vmem:[#allocation3 + $0xc0] sm:$0xff] %v694
        %699 = vst [vmem:[#allocation3 + $0xc8] sm:$0xff] %v695
        %700 = vst [vmem:[#allocation3 + $0xd0] sm:$0xff] %v696
        %701 = vst [vmem:[#allocation3 + $0xd8] sm:$0xff] %v697
        %v702 = vld [vmem:[#allocation2 + $0x8] sm:$0xff]
        %v703 = vld [vmem:[#allocation2 + $0x10] sm:$0xff]
        %v704 = vld [vmem:[#allocation2 + $0x18] sm:$0xff]
        %v705 = vld [vmem:[#allocation2 + $0x28] sm:$0xff]
        %v706 = vld [vmem:[#allocation2 + $0x30] sm:$0xff]
        %v707 = vld [vmem:[#allocation2 + $0x38] sm:$0xff]
        %714 = vrot.lane.b32.xlu0 %v702, 112
        %v715 = vpop.permute.xlu0 %714
        %716 = vrot.lane.b32.xlu0 %v703, 112
        %v717 = vpop.permute.xlu0 %716
        %718 = vrot.lane.b32.xlu0 %v704, 112
        %v719 = vpop.permute.xlu0 %718
        %720 = vrot.lane.b32.xlu0 %v705, 112
        %v721 = vpop.permute.xlu0 %720
        %722 = vrot.lane.b32.xlu0 %v706, 112
        %v723 = vpop.permute.xlu0 %722
        %724 = vrot.lane.b32.xlu0 %v707, 112
        %v725 = vpop.permute.xlu0 %724
        %vm726 = vcmask 916480
        %v727 = vsel %vm726, %v715, %v717
        %v728 = vsel %vm726, %v717, %v719
        %v729 = vsel %vm726, %v721, %v723
        %v730 = vsel %vm726, %v723, %v725
        %735 = vst [vmem:[#allocation3 + $0xe0] sm:$0xff] %v727
        %736 = vst [vmem:[#allocation3 + $0xe8] sm:$0xff] %v728
        %737 = vst [vmem:[#allocation3 + $0xf0] sm:$0xff] %v729
        %738 = vst [vmem:[#allocation3 + $0xf8] sm:$0xff] %v730
        %v739 = vld [vmem:[#allocation2 + $0x8] sm:$0xff]
        %v740 = vld [vmem:[#allocation2 + $0x10] sm:$0xff]
        %v741 = vld [vmem:[#allocation2 + $0x18] sm:$0xff]
        %v742 = vld [vmem:[#allocation2 + $0x28] sm:$0xff]
        %v743 = vld [vmem:[#allocation2 + $0x30] sm:$0xff]
        %v744 = vld [vmem:[#allocation2 + $0x38] sm:$0xff]
        %751 = vrot.lane.b32.xlu0 %v739, 111
        %v752 = vpop.permute.xlu0 %751
        %753 = vrot.lane.b32.xlu0 %v740, 111
        %v754 = vpop.permute.xlu0 %753
        %755 = vrot.lane.b32.xlu0 %v741, 111
        %v756 = vpop.permute.xlu0 %755
        %757 = vrot.lane.b32.xlu0 %v742, 111
        %v758 = vpop.permute.xlu0 %757
        %759 = vrot.lane.b32.xlu0 %v743, 111
        %v760 = vpop.permute.xlu0 %759
        %761 = vrot.lane.b32.xlu0 %v744, 111
        %v762 = vpop.permute.xlu0 %761
        %vm763 = vcmask 908288
        %v764 = vsel %vm763, %v752, %v754
        %v765 = vsel %vm763, %v754, %v756
        %v766 = vsel %vm763, %v758, %v760
        %v767 = vsel %vm763, %v760, %v762
        %v772 = vsel %vm534, %v764, 0.0
        %v773 = vsel %vm535, %v765, 0.0
        %v774 = vsel %vm534, %v766, 0.0
        %v775 = vsel %vm535, %v767, 0.0
        %776 = vst [vmem:[#allocation3 + $0x100] sm:$0xff] %v772
        %777 = vst [vmem:[#allocation3 + $0x108] sm:$0xff] %v773
        %778 = vst [vmem:[#allocation3 + $0x110] sm:$0xff] %v774
        %779 = vst [vmem:[#allocation3 + $0x118] sm:$0xff] %v775
        %v780 = vld [vmem:[#allocation4] sm:$0xff]
        %v781 = vld [vmem:[#allocation4 + $0x8] sm:$0xff]
        %v782 = vld [vmem:[#allocation4 + $0x10] sm:$0xff]
        %v783 = vld [vmem:[#allocation4 + $0x18] sm:$0xff]
        %v784 = vld [vmem:[#allocation4 + $0x20] sm:$0xff]
        %v785 = vld [vmem:[#allocation4 + $0x28] sm:$0xff]
        %v786 = vld [vmem:[#allocation4 + $0x30] sm:$0xff]
        %v787 = vld [vmem:[#allocation4 + $0x38] sm:$0xff]
        %v788 = vld [vmem:[#allocation3] sm:$0xff]
        %v789 = vld [vmem:[#allocation3 + $0x8] sm:$0xff]
        %v790 = vld [vmem:[#allocation3 + $0x10] sm:$0xff]
        %v791 = vld [vmem:[#allocation3 + $0x18] sm:$0xff]
        %v792 = vld [vmem:[#allocation3 + $0x20] sm:$0xff]
        %v793 = vld [vmem:[#allocation3 + $0x28] sm:$0xff]
        %v794 = vld [vmem:[#allocation3 + $0x30] sm:$0xff]
        %v795 = vld [vmem:[#allocation3 + $0x38] sm:$0xff]
        %v796 = vld [vmem:[#allocation3 + $0x40] sm:$0xff]
        %v797 = vld [vmem:[#allocation3 + $0x48] sm:$0xff]
        %v798 = vld [vmem:[#allocation3 + $0x50] sm:$0xff]
        %v799 = vld [vmem:[#allocation3 + $0x58] sm:$0xff]
        %v800 = vld [vmem:[#allocation3 + $0x60] sm:$0xff]
        %v801 = vld [vmem:[#allocation3 + $0x68] sm:$0xff]
        %v802 = vld [vmem:[#allocation3 + $0x70] sm:$0xff]
        %v803 = vld [vmem:[#allocation3 + $0x78] sm:$0xff]
        %v804 = vld [vmem:[#allocation3 + $0x80] sm:$0xff]
        %v805 = vld [vmem:[#allocation3 + $0x88] sm:$0xff]
        %v806 = vld [vmem:[#allocation3 + $0x90] sm:$0xff]
        %v807 = vld [vmem:[#allocation3 + $0x98] sm:$0xff]
        %v808 = vld [vmem:[#allocation3 + $0xa0] sm:$0xff]
        %v809 = vld [vmem:[#allocation3 + $0xa8] sm:$0xff]
        %v810 = vld [vmem:[#allocation3 + $0xb0] sm:$0xff]
        %v811 = vld [vmem:[#allocation3 + $0xb8] sm:$0xff]
        %v812 = vld [vmem:[#allocation3 + $0xc0] sm:$0xff]
        %v813 = vld [vmem:[#allocation3 + $0xc8] sm:$0xff]
        %v814 = vld [vmem:[#allocation3 + $0xd0] sm:$0xff]
        %v815 = vld [vmem:[#allocation3 + $0xd8] sm:$0xff]
        %v816 = vld [vmem:[#allocation3 + $0xe0] sm:$0xff]
        %v817 = vld [vmem:[#allocation3 + $0xe8] sm:$0xff]
        %v818 = vld [vmem:[#allocation3 + $0xf0] sm:$0xff]
        %v819 = vld [vmem:[#allocation3 + $0xf8] sm:$0xff]
        %v820 = vld [vmem:[#allocation3 + $0x100] sm:$0xff]
        %v821 = vld [vmem:[#allocation3 + $0x108] sm:$0xff]
        %v822 = vld [vmem:[#allocation3 + $0x110] sm:$0xff]
        %v823 = vld [vmem:[#allocation3 + $0x118] sm:$0xff]
        %v824 = vld [vmem:[%s1] sm:$0xff]
        %v825 = vld [vmem:[%s1 + $0x8] sm:$0xff]
        %v826 = vld [vmem:[%s1 + $0x10] sm:$0xff]
        %v827 = vld [vmem:[%s1 + $0x18] sm:$0xff]
        %829 = vset.pattern.permute.xlu0 0
        %830 = vperm.xlu0 %829, %v824
        %v831 = vpop.permute.xlu0 %830
        %834 = vset.pattern.permute.xlu0 0
        %835 = vperm.xlu0 %834, %v825
        %v836 = vpop.permute.xlu0 %835
        %839 = vset.pattern.permute.xlu0 0
        %840 = vperm.xlu0 %839, %v826
        %v841 = vpop.permute.xlu0 %840
        %844 = vset.pattern.permute.xlu0 0
        %845 = vperm.xlu0 %844, %v827
        %v846 = vpop.permute.xlu0 %845
        %v849 = vsel %vm513, %v781, 0
        %v852 = vsel %vm513, %v783, 0
        %v855 = vsel %vm513, %v785, 0
        %v858 = vsel %vm513, %v787, 0
        %860 = vmatprep.subr.mxu0 %v819
        %861 = vmatpush1.msra.mxu0 %v818
        %862 = vmatprep.subr.mxu0 %v817
        %863 = vmatpush1.msra.mxu0 %v816
        %864 = vmatprep.subr.mxu0 %v815
        %865 = vmatpush1.msra.mxu0 %v814
        %866 = vmatprep.subr.mxu0 %v813
        %867 = vmatpush1.msra.mxu0 %v812
        %868 = vmatprep.subr.mxu0 %v811
        %869 = vmatpush1.msra.mxu0 %v810
        %870 = vmatprep.subr.mxu0 %v809
        %871 = vmatpush1.msra.mxu0 %v808
        %872 = vmatprep.subr.mxu0 %v807
        %873 = vmatpush1.msra.mxu0 %v806
        %874 = vmatprep.subr.mxu0 %v805
        %875 = vmatpush1.msra.mxu0 %v804
        %876 = vmatprep.subr.mxu0 %v803
        %877 = vmatpush1.msra.mxu0 %v802
        %878 = vmatprep.subr.mxu0 %v801
        %879 = vmatpush1.msra.mxu0 %v800
        %880 = vmatprep.subr.mxu0 %v799
        %881 = vmatpush1.msra.mxu0 %v798
        %882 = vmatprep.subr.mxu0 %v797
        %883 = vmatpush1.msra.mxu0 %v796
        %884 = vmatprep.subr.mxu0 %v795
        %885 = vmatpush1.msra.mxu0 %v794
        %886 = vmatprep.subr.mxu0 %v793
        %887 = vmatpush1.msra.mxu0 %v792
        %888 = vmatprep.subr.mxu0 %v791
        %889 = vmatpush1.msra.mxu0 %v790
        %890 = vmatprep.subr.mxu0 %v789
        %891 = vmatpush1.msra.mxu0 %v788
        %892 = vmatprep.subr.mxu0 0.0
        %893 = vmatpush2.msra.mxu0 0.0
        %894 = vmatprep.subr.mxu0 0.0
        %895 = vmatpush2.msra.mxu0 0.0
        %896 = vmatprep.subr.mxu0 0.0
        %897 = vmatpush2.msra.mxu0 0.0
        %898 = vmatprep.subr.mxu0 0.0
        %899 = vmatpush2.msra.mxu0 0.0
        %900 = vmatprep.subr.mxu0 0.0
        %901 = vmatpush2.msra.mxu0 0.0
        %902 = vmatprep.subr.mxu0 0.0
        %903 = vmatpush2.msra.mxu0 0.0
        %904 = vmatprep.subr.mxu0 0.0
        %905 = vmatpush2.msra.mxu0 0.0
        %906 = vmatprep.subr.mxu0 0.0
        %907 = vmatpush2.msra.mxu0 0.0
        %908 = vmatprep.subr.mxu0 0.0
        %909 = vmatpush2.msra.mxu0 0.0
        %910 = vmatprep.subr.mxu0 0.0
        %911 = vmatpush2.msra.mxu0 0.0
        %912 = vmatprep.subr.mxu0 0.0
        %913 = vmatpush2.msra.mxu0 0.0
        %914 = vmatprep.subr.mxu0 0.0
        %915 = vmatpush2.msra.mxu0 0.0
        %916 = vmatprep.subr.mxu0 0.0
        %917 = vmatpush2.msra.mxu0 0.0
        %918 = vmatprep.subr.mxu0 0.0
        %919 = vmatpush2.msra.mxu0 0.0
        %920 = vmatprep.subr.mxu0 %v823
        %921 = vmatpush2.msra.mxu0 %v822
        %922 = vmatprep.subr.mxu0 %v821
        %923 = vmatpush2.msra.mxu0 %v820
        %924 = vmatprep.mubr.f32.mxu0 %v849
        %925 = vmatmul.mubr.f32.gmra.mxu0 %v780
        %v926 = vpop.f32.mrf.mxu0
        %v927 = vadd.f32 %v831, %v926
        %v928 = vpop.f32.mrf.mxu0
        %v929 = vadd.f32 %v831, %v928
        %930 = vmatprep.mubr.f32.mxu0 %v852
        %931 = vmatmul.mubr.f32.gmra.mxu0 %v782
        %v932 = vpop.f32.mrf.mxu0
        %v933 = vadd.f32 %v836, %v932
        %v934 = vpop.f32.mrf.mxu0
        %v935 = vadd.f32 %v836, %v934
        %936 = vmatprep.mubr.f32.mxu0 %v855
        %937 = vmatmul.mubr.f32.gmra.mxu0 %v784
        %v938 = vpop.f32.mrf.mxu0
        %v939 = vadd.f32 %v841, %v938
        %v940 = vpop.f32.mrf.mxu0
        %v941 = vadd.f32 %v841, %v940
        %942 = vmatprep.mubr.f32.mxu0 %v858
        %943 = vmatmul.mubr.f32.gmra.mxu0 %v786
        %v944 = vpop.f32.mrf.mxu0
        %v945 = vadd.f32 %v846, %v944
        %v946 = vpop.f32.mrf.mxu0
        %v947 = vadd.f32 %v846, %v946
        %948 = vdwg.mxu0
        %949 = vst [vmem:[%s363] sm:$0xff] %v927
        %950 = vst [vmem:[%s363 + $0x8] sm:$0xff] %v929
        %951 = vst [vmem:[%s363 + $0x10] sm:$0xff] %v933
        %952 = vst [vmem:[%s363 + $0x18] sm:$0xff] %v935
        %953 = vst [vmem:[%s363 + $0x20] sm:$0xff] %v939
        %954 = vst [vmem:[%s363 + $0x28] sm:$0xff] %v941
        %955 = vst [vmem:[%s363 + $0x30] sm:$0xff] %v945
        %956 = vst [vmem:[%s363 + $0x38] sm:$0xff] %v947
        %v957 = vxor.u32 %v927, 2147483648
        %v958 = vxor.u32 %v929, 2147483648
        %v959 = vmul.f32 %v957, 1.442695
        %v960 = vpow.pop %v959
        %v961 = vmul.f32 %v958, 1.442695
        %v962 = vpow.pop %v961
        %v963 = vadd.f32 %v960, 1.0
        %v964 = vadd.f32 %v962, 1.0
        %v965 = vrcp.pop %v963
        %v966 = vmul.f32 1.0, %v965
        %v967 = vrcp.pop %v964
        %v968 = vmul.f32 1.0, %v967
        %v969 = vxor.u32 %v933, 2147483648
        %v970 = vxor.u32 %v935, 2147483648
        %v971 = vmul.f32 %v969, 1.442695
        %v972 = vpow.pop %v971
        %v973 = vmul.f32 %v970, 1.442695
        %v974 = vpow.pop %v973
        %v975 = vadd.f32 %v972, 1.0
        %v976 = vadd.f32 %v974, 1.0
        %v977 = vrcp.pop %v975
        %v978 = vmul.f32 1.0, %v977
        %v979 = vrcp.pop %v976
        %v980 = vmul.f32 1.0, %v979
        %v981 = vxor.u32 %v939, 2147483648
        %v982 = vxor.u32 %v941, 2147483648
        %v983 = vmul.f32 %v981, 1.442695
        %v984 = vpow.pop %v983
        %v985 = vmul.f32 %v982, 1.442695
        %v986 = vpow.pop %v985
        %v987 = vadd.f32 %v984, 1.0
        %v988 = vadd.f32 %v986, 1.0
        %v989 = vrcp.pop %v987
        %v990 = vmul.f32 1.0, %v989
        %v991 = vrcp.pop %v988
        %v992 = vmul.f32 1.0, %v991
        %v993 = vtanh.pop %v945
        %v994 = vtanh.pop %v947
        %v995 = vld [vmem:[%s327] sm:$0xff]
        %v996 = vld [vmem:[%s327 + $0x8] sm:$0xff]
        %v997 = vmul.f32 %v978, %v995
        %v998 = vmul.f32 %v980, %v996
        %v999 = vmul.f32 %v966, %v993
        %v1000 = vmul.f32 %v968, %v994
        %v1001 = vadd.f32 %v997, %v999
        %v1002 = vadd.f32 %v998, %v1000
        %v1003 = vtanh.pop %v1001
        %v1004 = vtanh.pop %v1002
        %v1005 = vmul.f32 %v990, %v1003
        %v1006 = vmul.f32 %v992, %v1004
        %1007 = vst [vmem:[%s377] sm:$0xff] %v1001
        %1008 = vst [vmem:[%s377 + $0x8] sm:$0xff] %v1002
        %1009 = vst [vmem:[%s370] sm:$0xff] %v1005
        %1010 = vst [vmem:[%s370 + $0x8] sm:$0xff] %v1006
        %s1011 = sand.u32 %s157, 1
        %s1012 = scalar_lea.sflag [#allocation6], %s1011
        %s1013 = sand.u32 %s157, 1
        %s1014 = smul.addr %s1013, 64
        %s1015 = scalar_lea.vmem [#allocation10], %s1014
        %s1016 = sand.u32 %s29, 1
        %s1017 = scalar_lea.sflag [#allocation12], %s1016
        %s1018 = sand.u32 %s183, 1
        %s1019 = smul.addr %s1018, 16
        %s1020 = scalar_lea.vmem [#allocation11], %s1019
        %s1021 = sand.u32 %s29, 1
        %s1022 = scalar_lea.sflag [#allocation12], %s1021
        %s1023 = sand.u32 %s209, 1
        %s1024 = smul.addr %s1023, 16
        %s1025 = scalar_lea.vmem [#allocation13], %s1024
        // Predicated region
        $region53: #{tpu_custom_call.1} parent=39 // pred_check
          %p1026 = pneg %p167
        $region54: #{tpu_custom_call.1} parent=39 // pred_check_branch
          %1028 = sbr.rel (%p1026) target = $region56
        $region55: #{tpu_custom_call.1} parent=39 // pred_region
          %s1030 = ssub.s32 1024, 1024
          %1031 = vsyncadd %s1012, %s1030
          %s1032 = smul.addr %s29, 8
          %s1033 = smul.addr %s1032, 128
          %s1034 = scalar_lea.hbm %s5, %s1033
          %s1035 = sshll.u32 %s1015, 4
          %s1036 = int_to_ptr.vmem [resolvable:$true] %s1035
          %1041 = dma.vmem_to_hbm [thread:$0]  %s1036, 1024, %s1034, %s1012, 256, 256, 16
        $region56: #{tpu_custom_call.1} parent=39 // pred_fallthru
          _
        // Predicated region
        $region57: #{tpu_custom_call.1} parent=39 // pred_check
          %p1042 = pneg %p193
        $region58: #{tpu_custom_call.1} parent=39 // pred_check_branch
          %1044 = sbr.rel (%p1042) target = $region60
        $region59: #{tpu_custom_call.1} parent=39 // pred_region
          %s1046 = ssub.s32 256, 256
          %1047 = vsyncadd %s1017, %s1046
          %s1048 = smul.addr %s29, 2
          %s1049 = smul.addr %s1048, 128
          %s1050 = scalar_lea.hbm %s6, %s1049
          %s1052 = sshll.u32 %s1020, 4
          %s1053 = int_to_ptr.vmem [resolvable:$true] %s1052
          %1055 = dma.vmem_to_hbm [thread:$0]  %s1053, 256, %s1050, %s1017
        $region60: #{tpu_custom_call.1} parent=39 // pred_fallthru
          _
        // Predicated region
        $region61: #{tpu_custom_call.1} parent=39 // pred_check
          %p1056 = pneg %p219
        $region62: #{tpu_custom_call.1} parent=39 // pred_check_branch
          %1058 = sbr.rel (%p1056) target = $region64
        $region63: #{tpu_custom_call.1} parent=39 // pred_region
          %s1060 = ssub.s32 256, 256
          %1061 = vsyncadd %s1022, %s1060
          %s1062 = smul.addr %s29, 2
          %s1063 = smul.addr %s1062, 128
          %s1064 = scalar_lea.hbm %s7, %s1063
          %s1066 = sshll.u32 %s1025, 4
          %s1067 = int_to_ptr.vmem [resolvable:$true] %s1066
          %1069 = dma.vmem_to_hbm [thread:$0]  %s1067, 256, %s1064, %s1022
        $region64: #{tpu_custom_call.1} parent=39 // pred_fallthru
          _
      $region40: #{tpu_custom_call.1} parent=5 // pred_fallthru
        _
      %p1070 = scmp.le.s32.totalorder 2, %s24
      // Predicated region
      $region65: #{tpu_custom_call.1} parent=5 // pred_check
        %p1071 = pneg %p1070
      $region66: #{tpu_custom_call.1} parent=5 // pred_check_branch
        %1073 = sbr.rel (%p1071) target = $region68
      $region67: #{tpu_custom_call.1} parent=5 // pred_region
        %s1074 = ssub.s32 %s24, 2
        // Predicated region
        $region69: #{tpu_custom_call.1} parent=67 // pred_check
          %p1075 = pneg %p173
        $region70: #{tpu_custom_call.1} parent=67 // pred_check_branch
          %1077 = sbr.rel (%p1075) target = $region72
        $region71: #{tpu_custom_call.1} parent=67 // pred_region
          %s1078 = sand.u32 %s158, 1
          %s1079 = scalar_lea.sflag [#allocation6], %s1078
          %s1080 = sand.u32 %s158, 1
          %s1081 = smul.addr %s1080, 64
          %s1082 = scalar_lea.vmem [#allocation10], %s1081
          %1083 = dma.done %s1079, 1024
        $region72: #{tpu_custom_call.1} parent=67 // pred_fallthru
          _
        // Predicated region
        $region73: #{tpu_custom_call.1} parent=67 // pred_check
          %p1084 = pneg %p199
        $region74: #{tpu_custom_call.1} parent=67 // pred_check_branch
          %1086 = sbr.rel (%p1084) target = $region76
        $region75: #{tpu_custom_call.1} parent=67 // pred_region
          %s1087 = sand.u32 %s30, 1
          %s1088 = scalar_lea.sflag [#allocation12], %s1087
          %s1089 = sand.u32 %s184, 1
          %s1090 = smul.addr %s1089, 16
          %s1091 = scalar_lea.vmem [#allocation11], %s1090
          %1092 = dma.done %s1088, 256
        $region76: #{tpu_custom_call.1} parent=67 // pred_fallthru
          _
        // Predicated region
        $region77: #{tpu_custom_call.1} parent=67 // pred_check
          %p1093 = pneg %p225
        $region78: #{tpu_custom_call.1} parent=67 // pred_check_branch
          %1095 = sbr.rel (%p1093) target = $region80
        $region79: #{tpu_custom_call.1} parent=67 // pred_region
          %s1096 = sand.u32 %s30, 1
          %s1097 = scalar_lea.sflag [#allocation12], %s1096
          %s1098 = sand.u32 %s210, 1
          %s1099 = smul.addr %s1098, 16
          %s1100 = scalar_lea.vmem [#allocation13], %s1099
          %1101 = dma.done %s1097, 256
        $region80: #{tpu_custom_call.1} parent=67 // pred_fallthru
          _
      $region68: #{tpu_custom_call.1} parent=5 // pred_fallthru
        _
    $region6: #{tpu_custom_call.1} parent=1 // loop_footer
      %s28 = sadd.s32 1, %s24
    $region7: #{tpu_custom_call.1} parent=1 // loop_footer_branch
      %23 = sbr.rel target = $region3
    $region8: #{tpu_custom_call.1} parent=1 // loop_exit
      _
    %1102 = vsyncpa [#allocation5], 1
    %s1103 = scalar_lea.sflag [#allocation5], 1
    %1104 = vsyncpa %s1103, 1
    %1105 = vsyncpa [#allocation8], 1
    %s1106 = scalar_lea.sflag [#allocation8], 1
    %1107 = vsyncpa %s1106, 1
    %1108 = vsyncpa [#allocation6], 1
    %s1109 = scalar_lea.sflag [#allocation6], 1
    %1110 = vsyncpa %s1109, 1
    %1111 = vsyncpa [#allocation12], 1
    %s1112 = scalar_lea.sflag [#allocation12], 1
    %1113 = vsyncpa %s1112, 1

</llo_original>
